<compile_context>
chip_gen: v6e
topology: v6e:2x2x1
jax: 0.10.0
libtpu: 0.0.40
codegen_flags: <defaults>
</compile_context>

<pallas_src>
import functools

import jax
import jax.numpy as jnp
from jax.experimental import pallas as pl
from jax.experimental.pallas import tpu as pltpu


# ----------------------------------------------------------------------------
# Fused kernel (built per static config)
# ----------------------------------------------------------------------------
def _make_kernel(n_conv, n_obo, maxpool_size):
    def kernel(x_ref, *refs):
        refs = list(refs)
        conv_refs = [(refs[2 * i], refs[2 * i + 1]) for i in range(n_conv)]
        off = 2 * n_conv
        obo_refs = [(refs[off + 2 * i], refs[off + 2 * i + 1]) for i in range(n_obo)]
        off += 2 * n_obo
        pt_ref = refs[off]          # (D, Np)   prototypes, transposed
        wt_ref = refs[off + 1]      # (Np, C)   last_layer.weight transposed
        out_ref = refs[off + 2]     # (bt, 1, C)  softmax output block
        mind_ref = refs[off + 3]    # (bt, 1, Np) min-distance output block

        h = x_ref[...]                                       # (bt, L0, F) f32
        bt = h.shape[0]

        # ------------------------------------------------------------------
        # conv -> ReLU -> maxpool stages (batched; rows = time, lanes = C)
        # ------------------------------------------------------------------
        for i in range(n_conv):
            w_ref, b_ref = conv_refs[i]                      # (k, Cin, Cout), (1, Cout)
            k = w_ref.shape[0]
            if k % 2 == 1:
                p_left, p_right = k // 2, k // 2
            else:
                p_left, p_right = k // 2 - 1, k // 2
            _, L, cin = h.shape
            cout = w_ref.shape[2]

            # zero-pad along time, entirely in VMEM / vregs
            parts = []
            if p_left:
                parts.append(jnp.zeros((bt, p_left, cin), jnp.float32))
            parts.append(h)
            if p_right:
                parts.append(jnp.zeros((bt, p_right, cin), jnp.float32))
            hp = jnp.concatenate(parts, axis=1) if len(parts) > 1 else h

            # conv as k shifted batched matmuls (MXU), accumulated in f32
            acc = None
            for j in range(k):
                wj = jnp.broadcast_to(w_ref[j], (bt, cin, cout))
                contrib = jnp.einsum('bli,bio->blo', hp[:, j:j + L, :], wj,
                                     preferred_element_type=jnp.float32)
                acc = contrib if acc is None else acc + contrib
            y = jnp.maximum(acc + b_ref[...], 0.0)           # bias + ReLU epilogue

            # fused MaxPool1d(maxpool_size, maxpool_size) over the time axis
            mp = maxpool_size
            Lo = L // mp
            pooled = []
            for lo in range(Lo):
                win = y[:, lo * mp:lo * mp + 1, :]
                for j in range(1, mp):
                    win = jnp.maximum(win, y[:, lo * mp + j:lo * mp + j + 1, :])
                pooled.append(win)
            h = jnp.concatenate(pooled, axis=1) if Lo > 1 else pooled[0]

        # ------------------------------------------------------------------
        # 1x1 conv -> ReLU stages (batched matmuls)
        # ------------------------------------------------------------------
        for i in range(n_obo):
            w_ref, b_ref = obo_refs[i]                       # (Cin, Cout), (1, Cout)
            cin, cout = w_ref.shape
            wb = jnp.broadcast_to(w_ref[...], (bt, cin, cout))
            h = jnp.maximum(
                jnp.einsum('bpi,bio->bpo', h, wb,
                           preferred_element_type=jnp.float32) + b_ref[...], 0.0)

        # ------------------------------------------------------------------
        # prototype head: Gram-matrix L2 -> min over patches -> log-sim ->
        # linear (no bias) -> softmax
        # ------------------------------------------------------------------
        pt = pt_ref[...]                                     # (D, Np)
        D, Np = pt.shape
        P = h.shape[1]

        g = jnp.einsum('bpd,bdn->bpn', h, jnp.broadcast_to(pt, (bt, D, Np)),
                       preferred_element_type=jnp.float32)   # (bt, P, Np)
        z_sq = jnp.sum(h * h, axis=2, keepdims=True)         # (bt, P, 1)
        p_sq = jnp.sum(pt * pt, axis=0, keepdims=True)       # (1, Np)
        d2 = jnp.maximum(z_sq + p_sq - 2.0 * g, 0.0)
        dist = jnp.sqrt(d2)                                  # (bt, P, Np)

        mind = dist[:, 0:1, :]                               # min over patches
        for p in range(1, P):
            mind = jnp.minimum(mind, dist[:, p:p + 1, :])    # (bt, 1, Np)

        sim = jnp.log(mind + 1.0) - jnp.log(mind + 1e-4)     # 'log' activation
        wt = wt_ref[...]                                     # (Np, C)
        C = wt.shape[1]
        logits = jnp.einsum('bxn,bnc->bxc', sim,
                            jnp.broadcast_to(wt, (bt, Np, C)),
                            preferred_element_type=jnp.float32)  # (bt, 1, C)
        m = jnp.max(logits, axis=2, keepdims=True)
        e = jnp.exp(logits - m)
        probs = e * pl.reciprocal(jnp.sum(e, axis=2, keepdims=True), approx=True)

        out_ref[...] = probs
        mind_ref[...] = mind

    return kernel


# ----------------------------------------------------------------------------
# Wrapper: one pallas_call, grid over batch tiles (default: whole batch in one
# step -> zero per-sample grid overhead; set batch_tile for huge batches).
# ----------------------------------------------------------------------------
def proticu_forward(x, params, kernel_sizes, maxpool_size, batch_tile=None):
    """x: (B, L, F) float32 — same semantics as the torch module's `input`."""
    B, L0, F = x.shape
    conv_ws, conv_bs = params["conv_w"], params["conv_b"]
    obo_ws, obo_bs = params["obo_w"], params["obo_b"]
    pt = params["proto_t"]            # (D, Np)
    wt = params["last_w_t"]           # (Np, C)

    n_conv, n_obo = len(conv_ws), len(obo_ws)
    assert tuple(kernel_sizes) == tuple(int(w.shape[0]) for w in conv_ws)
    Np = pt.shape[1]
    C = wt.shape[1]

    bt = B if batch_tile is None else int(batch_tile)
    assert B % bt == 0, "batch_tile must divide the batch size"

    kernel = _make_kernel(n_conv, n_obo, maxpool_size)

    def _const_spec(a):
        nd = a.ndim
        return pl.BlockSpec(a.shape, lambda b, _nd=nd: (0,) * _nd)

    operands = [x]
    in_specs = [pl.BlockSpec((bt, L0, F), lambda b: (b, 0, 0))]
    for w, bias in zip(conv_ws, conv_bs):
        operands += [w, bias]
        in_specs += [_const_spec(w), _const_spec(bias)]
    for w, bias in zip(obo_ws, obo_bs):
        operands += [w, bias]
        in_specs += [_const_spec(w), _const_spec(bias)]
    operands += [pt, wt]
    in_specs += [_const_spec(pt), _const_spec(wt)]

    out3, mind3 = pl.pallas_call(
        kernel,
        out_shape=(jax.ShapeDtypeStruct((B, 1, C), jnp.float32),
                   jax.ShapeDtypeStruct((B, 1, Np), jnp.float32)),
        grid=(B // bt,),
        in_specs=in_specs,
        out_specs=(pl.BlockSpec((bt, 1, C), lambda b: (b, 0, 0)),
                   pl.BlockSpec((bt, 1, Np), lambda b: (b, 0, 0))),
        compiler_params=pltpu.CompilerParams(
            dimension_semantics=("parallel",)),
    )(*operands)

    return out3[:, 0, :], mind3[:, 0, :]


# ----------------------------------------------------------------------------
# Parameter init (deterministic; mirrors ProtICU.__init__ / init_weights),
# stored directly in kernel-ready layouts so the forward has zero glue.
# ----------------------------------------------------------------------------
def init_params(key, feat_dim, hidden_sizes, kernel_sizes, one_by_one_sizes,
                protop_classes, class_size):
    n_layers = len(hidden_sizes) + len(one_by_one_sizes) + 1
    keys = jax.random.split(key, n_layers)
    idx = 0

    conv_w, conv_b = [], []
    cin = feat_dim
    for h, k in zip(hidden_sizes, kernel_sizes):
        std = (2.0 / (h * k)) ** 0.5       # kaiming_normal, fan_out, relu
        w = std * jax.random.normal(keys[idx], (h, cin, k), jnp.float32)  # (Cout,Cin,K)
        conv_w.append(jnp.transpose(w, (2, 1, 0)))   # (K, Cin, Cout) tap-major
        conv_b.append(jnp.zeros((1, h), jnp.float32))
        cin = h
        idx += 1

    obo_w, obo_b = [], []
    for h in one_by_one_sizes:
        std = (2.0 / h) ** 0.5
        w = std * jax.random.normal(keys[idx], (h, cin, 1), jnp.float32)  # (Cout,Cin,1)
        obo_w.append(jnp.transpose(w[:, :, 0]))      # (Cin, Cout)
        obo_b.append(jnp.zeros((1, h), jnp.float32))
        cin = h
        idx += 1

    protos = jax.random.uniform(
        keys[idx], (len(protop_classes), one_by_one_sizes[-1]), jnp.float32)

    pc = jnp.asarray(protop_classes)
    # last_layer weight: +1 for matching class, -0.5 otherwise  -> (C, Np)
    last_w = jnp.where(pc[None, :] == jnp.arange(class_size)[:, None],
                       1.0, -0.5).astype(jnp.float32)

    return dict(conv_w=conv_w, conv_b=conv_b, obo_w=obo_w, obo_b=obo_b,
                proto_t=jnp.transpose(protos),       # (D, Np)
                last_w_t=jnp.transpose(last_w))      # (Np, C)


# ----------------------------------------------------------------------------
if __name__ == "__main__":
    # Small config consistent with the module's constructor
    batch, seqlen, feat = 2, 16, 4
    hidden_sizes = [8, 8]
    kernel_sizes = [3, 4]
    maxpool_size = 2
    one_by_one_sizes = [16, 8]
    protop_classes = [0, 0, 0, 1, 1, 1]
    class_size = 2

    key = jax.random.PRNGKey(0)
    k_param, k_x = jax.random.split(key)

    params = init_params(k_param, feat, hidden_sizes, kernel_sizes,
                         one_by_one_sizes, protop_classes, class_size)
    x = jax.random.normal(k_x, (batch, seqlen, feat), jnp.float32)

    fwd = jax.jit(functools.partial(proticu_forward,
                                    kernel_sizes=tuple(kernel_sizes),
                                    maxpool_size=maxpool_size))
    out, min_dis = fwd(x, params)
    jax.block_until_ready((out, min_dis))

    assert out.shape == (batch, class_size)
    assert min_dis.shape == (batch, len(protop_classes))
    assert bool(jnp.all(jnp.isfinite(out))) and bool(jnp.all(jnp.isfinite(min_dis)))
    # softmax rows should sum to ~1 (approx reciprocal => loose tolerance)
    assert bool(jnp.all(jnp.abs(jnp.sum(out, axis=1) - 1.0) < 1e-2))
    print("KERNEL_OK")
</pallas_src>

<mosaic_0001>
module attributes {stable_mosaic.version = 11 : i64} {
  func.func @kernel(%arg0: i32, %arg1: memref<2x16x4xf32, #tpu.memory_space<vmem>>, %arg2: memref<3x4x8xf32, #tpu.memory_space<vmem>>, %arg3: memref<1x8xf32, #tpu.memory_space<vmem>>, %arg4: memref<4x8x8xf32, #tpu.memory_space<vmem>>, %arg5: memref<1x8xf32, #tpu.memory_space<vmem>>, %arg6: memref<8x16xf32, #tpu.memory_space<vmem>>, %arg7: memref<1x16xf32, #tpu.memory_space<vmem>>, %arg8: memref<16x8xf32, #tpu.memory_space<vmem>>, %arg9: memref<1x8xf32, #tpu.memory_space<vmem>>, %arg10: memref<8x6xf32, #tpu.memory_space<vmem>>, %arg11: memref<6x2xf32, #tpu.memory_space<vmem>>, %arg12: memref<2x1x2xf32, #tpu.memory_space<vmem>>, %arg13: memref<2x1x6xf32, #tpu.memory_space<vmem>>) attributes {dimension_semantics = [#tpu.dimension_semantics<parallel>], iteration_bounds = array<i64: 1>, scalar_prefetch = 0 : i64, scratch_operands = 0 : i64, tpu.core_type = #tpu.core_type<tc>, window_params = [{transform_indices = @transform_0, window_bounds = array<i64: 2, 16, 4>}, {pipeline_mode = #tpu.pipeline_mode<synchronous>, transform_indices = @transform_1, window_bounds = array<i64: 3, 4, 8>}, {pipeline_mode = #tpu.pipeline_mode<synchronous>, transform_indices = @transform_2, window_bounds = array<i64: 1, 8>}, {pipeline_mode = #tpu.pipeline_mode<synchronous>, transform_indices = @transform_3, window_bounds = array<i64: 4, 8, 8>}, {pipeline_mode = #tpu.pipeline_mode<synchronous>, transform_indices = @transform_4, window_bounds = array<i64: 1, 8>}, {pipeline_mode = #tpu.pipeline_mode<synchronous>, transform_indices = @transform_5, window_bounds = array<i64: 8, 16>}, {pipeline_mode = #tpu.pipeline_mode<synchronous>, transform_indices = @transform_6, window_bounds = array<i64: 1, 16>}, {pipeline_mode = #tpu.pipeline_mode<synchronous>, transform_indices = @transform_7, window_bounds = array<i64: 16, 8>}, {pipeline_mode = #tpu.pipeline_mode<synchronous>, transform_indices = @transform_8, window_bounds = array<i64: 1, 8>}, {pipeline_mode = #tpu.pipeline_mode<synchronous>, transform_indices = @transform_9, window_bounds = array<i64: 8, 6>}, {pipeline_mode = #tpu.pipeline_mode<synchronous>, transform_indices = @transform_10, window_bounds = array<i64: 6, 2>}, {transform_indices = @transform_11, window_bounds = array<i64: 2, 1, 2>}, {transform_indices = @transform_12, window_bounds = array<i64: 2, 1, 6>}]} {
    %c0 = arith.constant 0 : index
    %c0_0 = arith.constant 0 : index
    %c0_1 = arith.constant 0 : index
    %0 = vector.load %arg1[%c0, %c0_0, %c0_1] : memref<2x16x4xf32, #tpu.memory_space<vmem>>, vector<2x16x4xf32>
    %cst = arith.constant 0.000000e+00 : f32
    %1 = vector.broadcast %cst : f32 to vector<2x1x4xf32>
    %cst_2 = arith.constant 0.000000e+00 : f32
    %2 = vector.broadcast %cst_2 : f32 to vector<2x1x4xf32>
    %3 = tpu.concatenate %1, %0, %2 in 1 : vector<2x1x4xf32>, vector<2x16x4xf32>, vector<2x1x4xf32> -> vector<2x18x4xf32>
    %c0_3 = arith.constant 0 : index
    %c0_4 = arith.constant 0 : index
    %c0_5 = arith.constant 0 : index
    %4 = vector.load %arg2[%c0_3, %c0_4, %c0_5] : memref<3x4x8xf32, #tpu.memory_space<vmem>>, vector<1x4x8xf32>
    %5 = vector.shape_cast %4 : vector<1x4x8xf32> to vector<4x8xf32>
    %6 = vector.shape_cast %5 : vector<4x8xf32> to vector<1x4x8xf32>
    %7 = vector.broadcast %6 : vector<1x4x8xf32> to vector<2x4x8xf32>
    %8 = vector.extract_strided_slice %3 {offsets = [0, 0, 0], sizes = [2, 16, 4], strides = [1, 1, 1]} : vector<2x18x4xf32> to vector<2x16x4xf32>
    "tpu.trace_start"() <{level = 10 : i32, message = "bli,bio->blo"}> : () -> ()
    %cst_6 = arith.constant dense<0.000000e+00> : vector<2x16x8xf32>
    %9 = tpu.matmul %8, %7, %cst_6 {dimension_numbers = #tpu.dot_dimension_numbers<[2], [1], [1], [2], [0, 0, 0, 1, 1, 2], [0], [0]>} : vector<2x16x4xf32>, vector<2x4x8xf32>, vector<2x16x8xf32> -> vector<2x16x8xf32>
    "tpu.trace_stop"() : () -> ()
    %c1 = arith.constant 1 : index
    %c0_7 = arith.constant 0 : index
    %c0_8 = arith.constant 0 : index
    %10 = vector.load %arg2[%c1, %c0_7, %c0_8] : memref<3x4x8xf32, #tpu.memory_space<vmem>>, vector<1x4x8xf32>
    %11 = vector.shape_cast %10 : vector<1x4x8xf32> to vector<4x8xf32>
    %12 = vector.shape_cast %11 : vector<4x8xf32> to vector<1x4x8xf32>
    %13 = vector.broadcast %12 : vector<1x4x8xf32> to vector<2x4x8xf32>
    %14 = vector.extract_strided_slice %3 {offsets = [0, 1, 0], sizes = [2, 16, 4], strides = [1, 1, 1]} : vector<2x18x4xf32> to vector<2x16x4xf32>
    "tpu.trace_start"() <{level = 10 : i32, message = "bli,bio->blo"}> : () -> ()
    %cst_9 = arith.constant dense<0.000000e+00> : vector<2x16x8xf32>
    %15 = tpu.matmul %14, %13, %cst_9 {dimension_numbers = #tpu.dot_dimension_numbers<[2], [1], [1], [2], [0, 0, 0, 1, 1, 2], [0], [0]>} : vector<2x16x4xf32>, vector<2x4x8xf32>, vector<2x16x8xf32> -> vector<2x16x8xf32>
    "tpu.trace_stop"() : () -> ()
    %16 = arith.addf %9, %15 : vector<2x16x8xf32>
    %c2 = arith.constant 2 : index
    %c0_10 = arith.constant 0 : index
    %c0_11 = arith.constant 0 : index
    %17 = vector.load %arg2[%c2, %c0_10, %c0_11] : memref<3x4x8xf32, #tpu.memory_space<vmem>>, vector<1x4x8xf32>
    %18 = vector.shape_cast %17 : vector<1x4x8xf32> to vector<4x8xf32>
    %19 = vector.shape_cast %18 : vector<4x8xf32> to vector<1x4x8xf32>
    %20 = vector.broadcast %19 : vector<1x4x8xf32> to vector<2x4x8xf32>
    %21 = vector.extract_strided_slice %3 {offsets = [0, 2, 0], sizes = [2, 16, 4], strides = [1, 1, 1]} : vector<2x18x4xf32> to vector<2x16x4xf32>
    "tpu.trace_start"() <{level = 10 : i32, message = "bli,bio->blo"}> : () -> ()
    %cst_12 = arith.constant dense<0.000000e+00> : vector<2x16x8xf32>
    %22 = tpu.matmul %21, %20, %cst_12 {dimension_numbers = #tpu.dot_dimension_numbers<[2], [1], [1], [2], [0, 0, 0, 1, 1, 2], [0], [0]>} : vector<2x16x4xf32>, vector<2x4x8xf32>, vector<2x16x8xf32> -> vector<2x16x8xf32>
    "tpu.trace_stop"() : () -> ()
    %23 = arith.addf %16, %22 : vector<2x16x8xf32>
    %c0_13 = arith.constant 0 : index
    %c0_14 = arith.constant 0 : index
    %24 = vector.load %arg3[%c0_13, %c0_14] : memref<1x8xf32, #tpu.memory_space<vmem>>, vector<1x8xf32>
    %25 = vector.shape_cast %24 : vector<1x8xf32> to vector<1x1x8xf32>
    %26 = vector.broadcast %25 : vector<1x1x8xf32> to vector<2x16x8xf32>
    %27 = arith.addf %23, %26 : vector<2x16x8xf32>
    %cst_15 = arith.constant 0.000000e+00 : f32
    %28 = vector.broadcast %cst_15 : f32 to vector<2x16x8xf32>
    %29 = arith.maximumf %27, %28 : vector<2x16x8xf32>
    %30 = vector.extract_strided_slice %29 {offsets = [0, 0, 0], sizes = [2, 1, 8], strides = [1, 1, 1]} : vector<2x16x8xf32> to vector<2x1x8xf32>
    %31 = vector.extract_strided_slice %29 {offsets = [0, 1, 0], sizes = [2, 1, 8], strides = [1, 1, 1]} : vector<2x16x8xf32> to vector<2x1x8xf32>
    %32 = arith.maximumf %30, %31 : vector<2x1x8xf32>
    %33 = vector.extract_strided_slice %29 {offsets = [0, 2, 0], sizes = [2, 1, 8], strides = [1, 1, 1]} : vector<2x16x8xf32> to vector<2x1x8xf32>
    %34 = vector.extract_strided_slice %29 {offsets = [0, 3, 0], sizes = [2, 1, 8], strides = [1, 1, 1]} : vector<2x16x8xf32> to vector<2x1x8xf32>
    %35 = arith.maximumf %33, %34 : vector<2x1x8xf32>
    %36 = vector.extract_strided_slice %29 {offsets = [0, 4, 0], sizes = [2, 1, 8], strides = [1, 1, 1]} : vector<2x16x8xf32> to vector<2x1x8xf32>
    %37 = vector.extract_strided_slice %29 {offsets = [0, 5, 0], sizes = [2, 1, 8], strides = [1, 1, 1]} : vector<2x16x8xf32> to vector<2x1x8xf32>
    %38 = arith.maximumf %36, %37 : vector<2x1x8xf32>
    %39 = vector.extract_strided_slice %29 {offsets = [0, 6, 0], sizes = [2, 1, 8], strides = [1, 1, 1]} : vector<2x16x8xf32> to vector<2x1x8xf32>
    %40 = vector.extract_strided_slice %29 {offsets = [0, 7, 0], sizes = [2, 1, 8], strides = [1, 1, 1]} : vector<2x16x8xf32> to vector<2x1x8xf32>
    %41 = arith.maximumf %39, %40 : vector<2x1x8xf32>
    %42 = vector.extract_strided_slice %29 {offsets = [0, 8, 0], sizes = [2, 1, 8], strides = [1, 1, 1]} : vector<2x16x8xf32> to vector<2x1x8xf32>
    %43 = vector.extract_strided_slice %29 {offsets = [0, 9, 0], sizes = [2, 1, 8], strides = [1, 1, 1]} : vector<2x16x8xf32> to vector<2x1x8xf32>
    %44 = arith.maximumf %42, %43 : vector<2x1x8xf32>
    %45 = vector.extract_strided_slice %29 {offsets = [0, 10, 0], sizes = [2, 1, 8], strides = [1, 1, 1]} : vector<2x16x8xf32> to vector<2x1x8xf32>
    %46 = vector.extract_strided_slice %29 {offsets = [0, 11, 0], sizes = [2, 1, 8], strides = [1, 1, 1]} : vector<2x16x8xf32> to vector<2x1x8xf32>
    %47 = arith.maximumf %45, %46 : vector<2x1x8xf32>
    %48 = vector.extract_strided_slice %29 {offsets = [0, 12, 0], sizes = [2, 1, 8], strides = [1, 1, 1]} : vector<2x16x8xf32> to vector<2x1x8xf32>
    %49 = vector.extract_strided_slice %29 {offsets = [0, 13, 0], sizes = [2, 1, 8], strides = [1, 1, 1]} : vector<2x16x8xf32> to vector<2x1x8xf32>
    %50 = arith.maximumf %48, %49 : vector<2x1x8xf32>
    %51 = vector.extract_strided_slice %29 {offsets = [0, 14, 0], sizes = [2, 1, 8], strides = [1, 1, 1]} : vector<2x16x8xf32> to vector<2x1x8xf32>
    %52 = vector.extract_strided_slice %29 {offsets = [0, 15, 0], sizes = [2, 1, 8], strides = [1, 1, 1]} : vector<2x16x8xf32> to vector<2x1x8xf32>
    %53 = arith.maximumf %51, %52 : vector<2x1x8xf32>
    %54 = tpu.concatenate %32, %35, %38, %41, %44, %47, %50, %53 in 1 : vector<2x1x8xf32>, vector<2x1x8xf32>, vector<2x1x8xf32>, vector<2x1x8xf32>, vector<2x1x8xf32>, vector<2x1x8xf32>, vector<2x1x8xf32>, vector<2x1x8xf32> -> vector<2x8x8xf32>
    %cst_16 = arith.constant 0.000000e+00 : f32
    %55 = vector.broadcast %cst_16 : f32 to vector<2x1x8xf32>
    %cst_17 = arith.constant 0.000000e+00 : f32
    %56 = vector.broadcast %cst_17 : f32 to vector<2x2x8xf32>
    %57 = tpu.concatenate %55, %54, %56 in 1 : vector<2x1x8xf32>, vector<2x8x8xf32>, vector<2x2x8xf32> -> vector<2x11x8xf32>
    %c0_18 = arith.constant 0 : index
    %c0_19 = arith.constant 0 : index
    %c0_20 = arith.constant 0 : index
    %58 = vector.load %arg4[%c0_18, %c0_19, %c0_20] : memref<4x8x8xf32, #tpu.memory_space<vmem>>, vector<1x8x8xf32>
    %59 = vector.shape_cast %58 : vector<1x8x8xf32> to vector<8x8xf32>
    %60 = vector.shape_cast %59 : vector<8x8xf32> to vector<1x8x8xf32>
    %61 = vector.broadcast %60 : vector<1x8x8xf32> to vector<2x8x8xf32>
    %62 = vector.extract_strided_slice %57 {offsets = [0, 0, 0], sizes = [2, 8, 8], strides = [1, 1, 1]} : vector<2x11x8xf32> to vector<2x8x8xf32>
    "tpu.trace_start"() <{level = 10 : i32, message = "bli,bio->blo"}> : () -> ()
    %cst_21 = arith.constant dense<0.000000e+00> : vector<2x8x8xf32>
    %63 = tpu.matmul %62, %61, %cst_21 {dimension_numbers = #tpu.dot_dimension_numbers<[2], [1], [1], [2], [0, 0, 0, 1, 1, 2], [0], [0]>} : vector<2x8x8xf32>, vector<2x8x8xf32>, vector<2x8x8xf32> -> vector<2x8x8xf32>
    "tpu.trace_stop"() : () -> ()
    %c1_22 = arith.constant 1 : index
    %c0_23 = arith.constant 0 : index
    %c0_24 = arith.constant 0 : index
    %64 = vector.load %arg4[%c1_22, %c0_23, %c0_24] : memref<4x8x8xf32, #tpu.memory_space<vmem>>, vector<1x8x8xf32>
    %65 = vector.shape_cast %64 : vector<1x8x8xf32> to vector<8x8xf32>
    %66 = vector.shape_cast %65 : vector<8x8xf32> to vector<1x8x8xf32>
    %67 = vector.broadcast %66 : vector<1x8x8xf32> to vector<2x8x8xf32>
    %68 = vector.extract_strided_slice %57 {offsets = [0, 1, 0], sizes = [2, 8, 8], strides = [1, 1, 1]} : vector<2x11x8xf32> to vector<2x8x8xf32>
    "tpu.trace_start"() <{level = 10 : i32, message = "bli,bio->blo"}> : () -> ()
    %cst_25 = arith.constant dense<0.000000e+00> : vector<2x8x8xf32>
    %69 = tpu.matmul %68, %67, %cst_25 {dimension_numbers = #tpu.dot_dimension_numbers<[2], [1], [1], [2], [0, 0, 0, 1, 1, 2], [0], [0]>} : vector<2x8x8xf32>, vector<2x8x8xf32>, vector<2x8x8xf32> -> vector<2x8x8xf32>
    "tpu.trace_stop"() : () -> ()
    %70 = arith.addf %63, %69 : vector<2x8x8xf32>
    %c2_26 = arith.constant 2 : index
    %c0_27 = arith.constant 0 : index
    %c0_28 = arith.constant 0 : index
    %71 = vector.load %arg4[%c2_26, %c0_27, %c0_28] : memref<4x8x8xf32, #tpu.memory_space<vmem>>, vector<1x8x8xf32>
    %72 = vector.shape_cast %71 : vector<1x8x8xf32> to vector<8x8xf32>
    %73 = vector.shape_cast %72 : vector<8x8xf32> to vector<1x8x8xf32>
    %74 = vector.broadcast %73 : vector<1x8x8xf32> to vector<2x8x8xf32>
    %75 = vector.extract_strided_slice %57 {offsets = [0, 2, 0], sizes = [2, 8, 8], strides = [1, 1, 1]} : vector<2x11x8xf32> to vector<2x8x8xf32>
    "tpu.trace_start"() <{level = 10 : i32, message = "bli,bio->blo"}> : () -> ()
    %cst_29 = arith.constant dense<0.000000e+00> : vector<2x8x8xf32>
    %76 = tpu.matmul %75, %74, %cst_29 {dimension_numbers = #tpu.dot_dimension_numbers<[2], [1], [1], [2], [0, 0, 0, 1, 1, 2], [0], [0]>} : vector<2x8x8xf32>, vector<2x8x8xf32>, vector<2x8x8xf32> -> vector<2x8x8xf32>
    "tpu.trace_stop"() : () -> ()
    %77 = arith.addf %70, %76 : vector<2x8x8xf32>
    %c3 = arith.constant 3 : index
    %c0_30 = arith.constant 0 : index
    %c0_31 = arith.constant 0 : index
    %78 = vector.load %arg4[%c3, %c0_30, %c0_31] : memref<4x8x8xf32, #tpu.memory_space<vmem>>, vector<1x8x8xf32>
    %79 = vector.shape_cast %78 : vector<1x8x8xf32> to vector<8x8xf32>
    %80 = vector.shape_cast %79 : vector<8x8xf32> to vector<1x8x8xf32>
    %81 = vector.broadcast %80 : vector<1x8x8xf32> to vector<2x8x8xf32>
    %82 = vector.extract_strided_slice %57 {offsets = [0, 3, 0], sizes = [2, 8, 8], strides = [1, 1, 1]} : vector<2x11x8xf32> to vector<2x8x8xf32>
    "tpu.trace_start"() <{level = 10 : i32, message = "bli,bio->blo"}> : () -> ()
    %cst_32 = arith.constant dense<0.000000e+00> : vector<2x8x8xf32>
    %83 = tpu.matmul %82, %81, %cst_32 {dimension_numbers = #tpu.dot_dimension_numbers<[2], [1], [1], [2], [0, 0, 0, 1, 1, 2], [0], [0]>} : vector<2x8x8xf32>, vector<2x8x8xf32>, vector<2x8x8xf32> -> vector<2x8x8xf32>
    "tpu.trace_stop"() : () -> ()
    %84 = arith.addf %77, %83 : vector<2x8x8xf32>
    %c0_33 = arith.constant 0 : index
    %c0_34 = arith.constant 0 : index
    %85 = vector.load %arg5[%c0_33, %c0_34] : memref<1x8xf32, #tpu.memory_space<vmem>>, vector<1x8xf32>
    %86 = vector.shape_cast %85 : vector<1x8xf32> to vector<1x1x8xf32>
    %87 = vector.broadcast %86 : vector<1x1x8xf32> to vector<2x8x8xf32>
    %88 = arith.addf %84, %87 : vector<2x8x8xf32>
    %cst_35 = arith.constant 0.000000e+00 : f32
    %89 = vector.broadcast %cst_35 : f32 to vector<2x8x8xf32>
    %90 = arith.maximumf %88, %89 : vector<2x8x8xf32>
    %91 = vector.extract_strided_slice %90 {offsets = [0, 0, 0], sizes = [2, 1, 8], strides = [1, 1, 1]} : vector<2x8x8xf32> to vector<2x1x8xf32>
    %92 = vector.extract_strided_slice %90 {offsets = [0, 1, 0], sizes = [2, 1, 8], strides = [1, 1, 1]} : vector<2x8x8xf32> to vector<2x1x8xf32>
    %93 = arith.maximumf %91, %92 : vector<2x1x8xf32>
    %94 = vector.extract_strided_slice %90 {offsets = [0, 2, 0], sizes = [2, 1, 8], strides = [1, 1, 1]} : vector<2x8x8xf32> to vector<2x1x8xf32>
    %95 = vector.extract_strided_slice %90 {offsets = [0, 3, 0], sizes = [2, 1, 8], strides = [1, 1, 1]} : vector<2x8x8xf32> to vector<2x1x8xf32>
    %96 = arith.maximumf %94, %95 : vector<2x1x8xf32>
    %97 = vector.extract_strided_slice %90 {offsets = [0, 4, 0], sizes = [2, 1, 8], strides = [1, 1, 1]} : vector<2x8x8xf32> to vector<2x1x8xf32>
    %98 = vector.extract_strided_slice %90 {offsets = [0, 5, 0], sizes = [2, 1, 8], strides = [1, 1, 1]} : vector<2x8x8xf32> to vector<2x1x8xf32>
    %99 = arith.maximumf %97, %98 : vector<2x1x8xf32>
    %100 = vector.extract_strided_slice %90 {offsets = [0, 6, 0], sizes = [2, 1, 8], strides = [1, 1, 1]} : vector<2x8x8xf32> to vector<2x1x8xf32>
    %101 = vector.extract_strided_slice %90 {offsets = [0, 7, 0], sizes = [2, 1, 8], strides = [1, 1, 1]} : vector<2x8x8xf32> to vector<2x1x8xf32>
    %102 = arith.maximumf %100, %101 : vector<2x1x8xf32>
    %103 = tpu.concatenate %93, %96, %99, %102 in 1 : vector<2x1x8xf32>, vector<2x1x8xf32>, vector<2x1x8xf32>, vector<2x1x8xf32> -> vector<2x4x8xf32>
    %c0_36 = arith.constant 0 : index
    %c0_37 = arith.constant 0 : index
    %104 = vector.load %arg6[%c0_36, %c0_37] : memref<8x16xf32, #tpu.memory_space<vmem>>, vector<8x16xf32>
    %105 = vector.shape_cast %104 : vector<8x16xf32> to vector<1x8x16xf32>
    %106 = vector.broadcast %105 : vector<1x8x16xf32> to vector<2x8x16xf32>
    "tpu.trace_start"() <{level = 10 : i32, message = "bpi,bio->bpo"}> : () -> ()
    %cst_38 = arith.constant dense<0.000000e+00> : vector<2x4x16xf32>
    %107 = tpu.matmul %103, %106, %cst_38 {dimension_numbers = #tpu.dot_dimension_numbers<[2], [1], [1], [2], [0, 0, 0, 1, 1, 2], [0], [0]>} : vector<2x4x8xf32>, vector<2x8x16xf32>, vector<2x4x16xf32> -> vector<2x4x16xf32>
    "tpu.trace_stop"() : () -> ()
    %c0_39 = arith.constant 0 : index
    %c0_40 = arith.constant 0 : index
    %108 = vector.load %arg7[%c0_39, %c0_40] : memref<1x16xf32, #tpu.memory_space<vmem>>, vector<1x16xf32>
    %109 = vector.shape_cast %108 : vector<1x16xf32> to vector<1x1x16xf32>
    %110 = vector.broadcast %109 : vector<1x1x16xf32> to vector<2x4x16xf32>
    %111 = arith.addf %107, %110 : vector<2x4x16xf32>
    %cst_41 = arith.constant 0.000000e+00 : f32
    %112 = vector.broadcast %cst_41 : f32 to vector<2x4x16xf32>
    %113 = arith.maximumf %111, %112 : vector<2x4x16xf32>
    %c0_42 = arith.constant 0 : index
    %c0_43 = arith.constant 0 : index
    %114 = vector.load %arg8[%c0_42, %c0_43] : memref<16x8xf32, #tpu.memory_space<vmem>>, vector<16x8xf32>
    %115 = vector.shape_cast %114 : vector<16x8xf32> to vector<1x16x8xf32>
    %116 = vector.broadcast %115 : vector<1x16x8xf32> to vector<2x16x8xf32>
    "tpu.trace_start"() <{level = 10 : i32, message = "bpi,bio->bpo"}> : () -> ()
    %cst_44 = arith.constant dense<0.000000e+00> : vector<2x4x8xf32>
    %117 = tpu.matmul %113, %116, %cst_44 {dimension_numbers = #tpu.dot_dimension_numbers<[2], [1], [1], [2], [0, 0, 0, 1, 1, 2], [0], [0]>} : vector<2x4x16xf32>, vector<2x16x8xf32>, vector<2x4x8xf32> -> vector<2x4x8xf32>
    "tpu.trace_stop"() : () -> ()
    %c0_45 = arith.constant 0 : index
    %c0_46 = arith.constant 0 : index
    %118 = vector.load %arg9[%c0_45, %c0_46] : memref<1x8xf32, #tpu.memory_space<vmem>>, vector<1x8xf32>
    %119 = vector.shape_cast %118 : vector<1x8xf32> to vector<1x1x8xf32>
    %120 = vector.broadcast %119 : vector<1x1x8xf32> to vector<2x4x8xf32>
    %121 = arith.addf %117, %120 : vector<2x4x8xf32>
    %cst_47 = arith.constant 0.000000e+00 : f32
    %122 = vector.broadcast %cst_47 : f32 to vector<2x4x8xf32>
    %123 = arith.maximumf %121, %122 : vector<2x4x8xf32>
    %c0_48 = arith.constant 0 : index
    %c0_49 = arith.constant 0 : index
    %124 = vector.load %arg10[%c0_48, %c0_49] : memref<8x6xf32, #tpu.memory_space<vmem>>, vector<8x6xf32>
    %125 = vector.shape_cast %124 : vector<8x6xf32> to vector<1x8x6xf32>
    %126 = vector.broadcast %125 : vector<1x8x6xf32> to vector<2x8x6xf32>
    "tpu.trace_start"() <{level = 10 : i32, message = "bpd,bdn->bpn"}> : () -> ()
    %cst_50 = arith.constant dense<0.000000e+00> : vector<2x4x6xf32>
    %127 = tpu.matmul %123, %126, %cst_50 {dimension_numbers = #tpu.dot_dimension_numbers<[2], [1], [1], [2], [0, 0, 0, 1, 1, 2], [0], [0]>} : vector<2x4x8xf32>, vector<2x8x6xf32>, vector<2x4x6xf32> -> vector<2x4x6xf32>
    "tpu.trace_stop"() : () -> ()
    %128 = arith.mulf %123, %123 : vector<2x4x8xf32>
    %cst_51 = arith.constant dense<0.000000e+00> : vector<2x4xf32>
    %129 = vector.multi_reduction <add>, %128, %cst_51 [2] : vector<2x4x8xf32> to vector<2x4xf32>
    %130 = vector.shape_cast %129 : vector<2x4xf32> to vector<2x4x1xf32>
    %131 = arith.mulf %124, %124 : vector<8x6xf32>
    %cst_52 = arith.constant dense<0.000000e+00> : vector<6xf32>
    %132 = vector.multi_reduction <add>, %131, %cst_52 [0] : vector<8x6xf32> to vector<6xf32>
    %133 = vector.shape_cast %132 : vector<6xf32> to vector<1x6xf32>
    %134 = vector.shape_cast %133 : vector<1x6xf32> to vector<1x1x6xf32>
    %135 = vector.broadcast %130 : vector<2x4x1xf32> to vector<2x4x6xf32>
    %136 = vector.broadcast %134 : vector<1x1x6xf32> to vector<2x4x6xf32>
    %137 = arith.addf %135, %136 : vector<2x4x6xf32>
    %cst_53 = arith.constant 2.000000e+00 : f32
    %138 = vector.broadcast %cst_53 : f32 to vector<2x4x6xf32>
    %139 = arith.mulf %138, %127 : vector<2x4x6xf32>
    %140 = arith.subf %137, %139 : vector<2x4x6xf32>
    %cst_54 = arith.constant 0.000000e+00 : f32
    %141 = vector.broadcast %cst_54 : f32 to vector<2x4x6xf32>
    %142 = arith.maximumf %140, %141 : vector<2x4x6xf32>
    %143 = math.sqrt %142 : vector<2x4x6xf32>
    %144 = vector.extract_strided_slice %143 {offsets = [0, 0, 0], sizes = [2, 1, 6], strides = [1, 1, 1]} : vector<2x4x6xf32> to vector<2x1x6xf32>
    %145 = vector.extract_strided_slice %143 {offsets = [0, 1, 0], sizes = [2, 1, 6], strides = [1, 1, 1]} : vector<2x4x6xf32> to vector<2x1x6xf32>
    %146 = arith.minimumf %144, %145 : vector<2x1x6xf32>
    %147 = vector.extract_strided_slice %143 {offsets = [0, 2, 0], sizes = [2, 1, 6], strides = [1, 1, 1]} : vector<2x4x6xf32> to vector<2x1x6xf32>
    %148 = arith.minimumf %146, %147 : vector<2x1x6xf32>
    %149 = vector.extract_strided_slice %143 {offsets = [0, 3, 0], sizes = [2, 1, 6], strides = [1, 1, 1]} : vector<2x4x6xf32> to vector<2x1x6xf32>
    %150 = arith.minimumf %148, %149 : vector<2x1x6xf32>
    %cst_55 = arith.constant 1.000000e+00 : f32
    %151 = vector.broadcast %cst_55 : f32 to vector<2x1x6xf32>
    %152 = arith.addf %150, %151 : vector<2x1x6xf32>
    %153 = math.log %152 : vector<2x1x6xf32>
    %cst_56 = arith.constant 9.99999974E-5 : f32
    %154 = vector.broadcast %cst_56 : f32 to vector<2x1x6xf32>
    %155 = arith.addf %150, %154 : vector<2x1x6xf32>
    %156 = math.log %155 : vector<2x1x6xf32>
    %157 = arith.subf %153, %156 : vector<2x1x6xf32>
    %c0_57 = arith.constant 0 : index
    %c0_58 = arith.constant 0 : index
    %158 = vector.load %arg11[%c0_57, %c0_58] : memref<6x2xf32, #tpu.memory_space<vmem>>, vector<6x2xf32>
    %159 = vector.shape_cast %158 : vector<6x2xf32> to vector<1x6x2xf32>
    %160 = vector.broadcast %159 : vector<1x6x2xf32> to vector<2x6x2xf32>
    "tpu.trace_start"() <{level = 10 : i32, message = "bxn,bnc->bxc"}> : () -> ()
    %cst_59 = arith.constant dense<0.000000e+00> : vector<2x1x2xf32>
    %161 = tpu.matmul %157, %160, %cst_59 {dimension_numbers = #tpu.dot_dimension_numbers<[2], [1], [1], [2], [0, 0, 0, 1, 1, 2], [0], [0]>} : vector<2x1x6xf32>, vector<2x6x2xf32>, vector<2x1x2xf32> -> vector<2x1x2xf32>
    "tpu.trace_stop"() : () -> ()
    %cst_60 = arith.constant dense<0xFF800000> : vector<2x1xf32>
    %162 = vector.multi_reduction <maximumf>, %161, %cst_60 [2] : vector<2x1x2xf32> to vector<2x1xf32>
    %163 = vector.shape_cast %162 : vector<2x1xf32> to vector<2x1x1xf32>
    %164 = vector.broadcast %163 : vector<2x1x1xf32> to vector<2x1x2xf32>
    %165 = arith.subf %161, %164 : vector<2x1x2xf32>
    %166 = math.exp %165 : vector<2x1x2xf32>
    %cst_61 = arith.constant dense<0.000000e+00> : vector<2x1xf32>
    %167 = vector.multi_reduction <add>, %166, %cst_61 [2] : vector<2x1x2xf32> to vector<2x1xf32>
    %168 = vector.shape_cast %167 : vector<2x1xf32> to vector<2x1x1xf32>
    %169 = tpu.reciprocal %168 {approx = true} : vector<2x1x1xf32> -> vector<2x1x1xf32>
    %170 = vector.broadcast %169 : vector<2x1x1xf32> to vector<2x1x2xf32>
    %171 = arith.mulf %166, %170 : vector<2x1x2xf32>
    %c0_62 = arith.constant 0 : index
    %c0_63 = arith.constant 0 : index
    %c0_64 = arith.constant 0 : index
    %172 = vector.load %arg12[%c0_62, %c0_63, %c0_64] : memref<2x1x2xf32, #tpu.memory_space<vmem>>, vector<2x1x2xf32>
    tpu.vector_store %arg12[%c0_62, %c0_63, %c0_64], %171 {strides = array<i32>} : memref<2x1x2xf32, #tpu.memory_space<vmem>>, vector<2x1x2xf32>,
    %c0_65 = arith.constant 0 : index
    %c0_66 = arith.constant 0 : index
    %c0_67 = arith.constant 0 : index
    %173 = vector.load %arg13[%c0_65, %c0_66, %c0_67] : memref<2x1x6xf32, #tpu.memory_space<vmem>>, vector<2x1x6xf32>
    tpu.vector_store %arg13[%c0_65, %c0_66, %c0_67], %150 {strides = array<i32>} : memref<2x1x6xf32, #tpu.memory_space<vmem>>, vector<2x1x6xf32>,
    return
  }
  func.func @transform_0(%arg0: i32) -> (i32, i32, i32) {
    %c0_i32 = arith.constant 0 : i32
    %c0_i32_0 = arith.constant 0 : i32
    %c0_i32_1 = arith.constant 0 : i32
    return %arg0, %c0_i32, %c0_i32_0 : i32, i32, i32
  }
  func.func @transform_1(%arg0: i32) -> (i32, i32, i32) {
    %c0_i32 = arith.constant 0 : i32
    %c0_i32_0 = arith.constant 0 : i32
    %c0_i32_1 = arith.constant 0 : i32
    %c0_i32_2 = arith.constant 0 : i32
    return %c0_i32, %c0_i32_0, %c0_i32_1 : i32, i32, i32
  }
  func.func @transform_2(%arg0: i32) -> (i32, i32) {
    %c0_i32 = arith.constant 0 : i32
    %c0_i32_0 = arith.constant 0 : i32
    %c0_i32_1 = arith.constant 0 : i32
    return %c0_i32, %c0_i32_0 : i32, i32
  }
  func.func @transform_3(%arg0: i32) -> (i32, i32, i32) {
    %c0_i32 = arith.constant 0 : i32
    %c0_i32_0 = arith.constant 0 : i32
    %c0_i32_1 = arith.constant 0 : i32
    %c0_i32_2 = arith.constant 0 : i32
    return %c0_i32, %c0_i32_0, %c0_i32_1 : i32, i32, i32
  }
  func.func @transform_4(%arg0: i32) -> (i32, i32) {
    %c0_i32 = arith.constant 0 : i32
    %c0_i32_0 = arith.constant 0 : i32
    %c0_i32_1 = arith.constant 0 : i32
    return %c0_i32, %c0_i32_0 : i32, i32
  }
  func.func @transform_5(%arg0: i32) -> (i32, i32) {
    %c0_i32 = arith.constant 0 : i32
    %c0_i32_0 = arith.constant 0 : i32
    %c0_i32_1 = arith.constant 0 : i32
    return %c0_i32, %c0_i32_0 : i32, i32
  }
  func.func @transform_6(%arg0: i32) -> (i32, i32) {
    %c0_i32 = arith.constant 0 : i32
    %c0_i32_0 = arith.constant 0 : i32
    %c0_i32_1 = arith.constant 0 : i32
    return %c0_i32, %c0_i32_0 : i32, i32
  }
  func.func @transform_7(%arg0: i32) -> (i32, i32) {
    %c0_i32 = arith.constant 0 : i32
    %c0_i32_0 = arith.constant 0 : i32
    %c0_i32_1 = arith.constant 0 : i32
    return %c0_i32, %c0_i32_0 : i32, i32
  }
  func.func @transform_8(%arg0: i32) -> (i32, i32) {
    %c0_i32 = arith.constant 0 : i32
    %c0_i32_0 = arith.constant 0 : i32
    %c0_i32_1 = arith.constant 0 : i32
    return %c0_i32, %c0_i32_0 : i32, i32
  }
  func.func @transform_9(%arg0: i32) -> (i32, i32) {
    %c0_i32 = arith.constant 0 : i32
    %c0_i32_0 = arith.constant 0 : i32
    %c0_i32_1 = arith.constant 0 : i32
    return %c0_i32, %c0_i32_0 : i32, i32
  }
  func.func @transform_10(%arg0: i32) -> (i32, i32) {
    %c0_i32 = arith.constant 0 : i32
    %c0_i32_0 = arith.constant 0 : i32
    %c0_i32_1 = arith.constant 0 : i32
    return %c0_i32, %c0_i32_0 : i32, i32
  }
  func.func @transform_11(%arg0: i32) -> (i32, i32, i32) {
    %c0_i32 = arith.constant 0 : i32
    %c0_i32_0 = arith.constant 0 : i32
    %c0_i32_1 = arith.constant 0 : i32
    return %arg0, %c0_i32, %c0_i32_0 : i32, i32, i32
  }
  func.func @transform_12(%arg0: i32) -> (i32, i32, i32) {
    %c0_i32 = arith.constant 0 : i32
    %c0_i32_0 = arith.constant 0 : i32
    %c0_i32_1 = arith.constant 0 : i32
    return %arg0, %c0_i32, %c0_i32_0 : i32, i32, i32
  }
}

</mosaic_0001>

<llo_original>
// kernel: proticu_forward.1
$region0: #{proticu_forward.1}
  #allocation0 [shape = 'u32[]', space=smem, size = 0x4, offset = 0x4, fixed_abs, tag = 'smem constant byte address 0x4 - core index']
  #allocation1 [shape = 'u32[144,128]{1,0:T(1,128)}', space=vmem, size = 0x12000, scoped, tag = 'internal scratch']
  %s0 = inlined_call_operand.vmem [shape: f32[2,16,4], index: 0, kind: input, shape index: {}]
  %s1 = inlined_call_operand.vmem [shape: f32[3,4,8], index: 1, kind: input, shape index: {}]
  %s2 = inlined_call_operand.vmem [shape: f32[1,8], index: 2, kind: input, shape index: {}]
  %s3 = inlined_call_operand.vmem [shape: f32[4,8,8], index: 3, kind: input, shape index: {}]
  %s4 = inlined_call_operand.vmem [shape: f32[1,8], index: 4, kind: input, shape index: {}]
  %s5 = inlined_call_operand.vmem [shape: f32[8,16], index: 5, kind: input, shape index: {}]
  %s6 = inlined_call_operand.vmem [shape: f32[1,16], index: 6, kind: input, shape index: {}]
  %s7 = inlined_call_operand.vmem [shape: f32[16,8], index: 7, kind: input, shape index: {}]
  %s8 = inlined_call_operand.vmem [shape: f32[1,8], index: 8, kind: input, shape index: {}]
  %s9 = inlined_call_operand.vmem [shape: f32[8,6], index: 9, kind: input, shape index: {}]
  %s10 = inlined_call_operand.vmem [shape: f32[6,2], index: 10, kind: input, shape index: {}]
  %s11 = inlined_call_operand.hbm [shape: f32[2,1,2], index: 11, kind: output, shape index: {0}]
  %s12 = inlined_call_operand.hbm [shape: f32[2,1,6], index: 12, kind: output, shape index: {1}]
  %13 = xla_tuple %s11, %s12
  %s14 = sld [smem:[#allocation0]]
  $region62: #{proticu_forward.1} parent=0
    _
  %s16 = ssub.s32 1, %s14
  %s17 = scalar_select 0, %s16, %s14
  $region1: #{proticu_forward.1} parent=0
    #allocation2 [shape = 'u8[1024]{0}', space=vmem, size = 0x400, scoped, tag = 'output window, operand 0, single buffered']
    #allocation3 [shape = 's32[1]{0}', space=sflag, size = 0x4, scoped, tag = 'scoped memory for proticu_forward.1']
    #allocation4 [shape = 'u8[1024]{0}', space=vmem, size = 0x400, scoped, tag = 'output window, operand 1, single buffered']
    #allocation5 [shape = 's32[1]{0}', space=sflag, size = 0x4, scoped, tag = 'scoped memory for proticu_forward.1']
    %18 = vsyncpa [#allocation3], 0
    %19 = vsyncpa [#allocation5], 0
    // Predicated region
    $region2: #{proticu_forward.1} parent=1 // pred_check
      _
    $region3: #{proticu_forward.1} parent=1 // pred_check_branch
      %21 = sbr.rel (0) target = $region5
    $region4: #{proticu_forward.1} parent=1 // pred_region
      _
    $region5: #{proticu_forward.1} parent=1 // pred_fallthru
      _
    // Predicated region
    $region6: #{proticu_forward.1} parent=1 // pred_check
      _
    $region7: #{proticu_forward.1} parent=1 // pred_check_branch
      %23 = sbr.rel (0) target = $region9
    $region8: #{proticu_forward.1} parent=1 // pred_region
      _
    $region9: #{proticu_forward.1} parent=1 // pred_fallthru
      _
    // Predicated region
    $region10: #{proticu_forward.1} parent=1 // pred_check
      _
    $region11: #{proticu_forward.1} parent=1 // pred_check_branch
      %25 = sbr.rel (0) target = $region13
    $region12: #{proticu_forward.1} parent=1 // pred_region
      _
    $region13: #{proticu_forward.1} parent=1 // pred_fallthru
      _
    // Predicated region
    $region14: #{proticu_forward.1} parent=1 // pred_check
      _
    $region15: #{proticu_forward.1} parent=1 // pred_check_branch
      %27 = sbr.rel (0) target = $region17
    $region16: #{proticu_forward.1} parent=1 // pred_region
      _
    $region17: #{proticu_forward.1} parent=1 // pred_fallthru
      _
    // Predicated region
    $region18: #{proticu_forward.1} parent=1 // pred_check
      _
    $region19: #{proticu_forward.1} parent=1 // pred_check_branch
      %29 = sbr.rel (0) target = $region21
    $region20: #{proticu_forward.1} parent=1 // pred_region
      _
    $region21: #{proticu_forward.1} parent=1 // pred_fallthru
      _
    // Predicated region
    $region22: #{proticu_forward.1} parent=1 // pred_check
      _
    $region23: #{proticu_forward.1} parent=1 // pred_check_branch
      %31 = sbr.rel (0) target = $region25
    $region24: #{proticu_forward.1} parent=1 // pred_region
      _
    $region25: #{proticu_forward.1} parent=1 // pred_fallthru
      _
    // Predicated region
    $region26: #{proticu_forward.1} parent=1 // pred_check
      _
    $region27: #{proticu_forward.1} parent=1 // pred_check_branch
      %33 = sbr.rel (0) target = $region29
    $region28: #{proticu_forward.1} parent=1 // pred_region
      _
    $region29: #{proticu_forward.1} parent=1 // pred_fallthru
      _
    // Predicated region
    $region30: #{proticu_forward.1} parent=1 // pred_check
      _
    $region31: #{proticu_forward.1} parent=1 // pred_check_branch
      %35 = sbr.rel (0) target = $region33
    $region32: #{proticu_forward.1} parent=1 // pred_region
      _
    $region33: #{proticu_forward.1} parent=1 // pred_fallthru
      _
    // Predicated region
    $region34: #{proticu_forward.1} parent=1 // pred_check
      _
    $region35: #{proticu_forward.1} parent=1 // pred_check_branch
      %37 = sbr.rel (0) target = $region37
    $region36: #{proticu_forward.1} parent=1 // pred_region
      _
    $region37: #{proticu_forward.1} parent=1 // pred_fallthru
      _
    // Predicated region
    $region38: #{proticu_forward.1} parent=1 // pred_check
      _
    $region39: #{proticu_forward.1} parent=1 // pred_check_branch
      %39 = sbr.rel (0) target = $region41
    $region40: #{proticu_forward.1} parent=1 // pred_region
      _
    $region41: #{proticu_forward.1} parent=1 // pred_fallthru
      _
    // Predicated region
    $region42: #{proticu_forward.1} parent=1 // pred_check
      _
    $region43: #{proticu_forward.1} parent=1 // pred_check_branch
      %41 = sbr.rel (0) target = $region45
    $region44: #{proticu_forward.1} parent=1 // pred_region
      _
    $region45: #{proticu_forward.1} parent=1 // pred_fallthru
      _
    %v42 = vld [vmem:[%s0] sm:$0xff]
    %v43 = vld [vmem:[%s0 + $0x8] sm:$0xff]
    %v44 = vld [vmem:[%s0 + $0x10] sm:$0xff]
    %v45 = vld [vmem:[%s0 + $0x18] sm:$0xff]
    %vm50 = vcmask 1040384
    %v51 = vrot.slane %v42, 7
    %v52 = vrot.slane %v43, 7
    %v53 = vsel %vm50, %v51, %v52
    %v54 = vrot.slane %v44, 7
    %v55 = vrot.slane %v45, 7
    %v56 = vsel %vm50, %v54, %v55
    %v61 = vsel %vm50, 0.0, %v51
    %v62 = vsel %vm50, 0.0, %v54
    %v63 = vsel %vm50, %v52, 0.0
    %v64 = vsel %vm50, %v55, 0.0
    %v65 = vld [vmem:[%s1] sm:$0xf]
    %s66 = scalar_lea.vmem %s1, 4
    %v67 = vld [vmem:[%s66] sm:$0xf]
    %vm70 = vcmask 1046528
    %v71 = vrot.slane %v61, 1
    %v72 = vrot.slane %v53, 1
    %v73 = vsel %vm70, %v71, %v72
    %v74 = vrot.slane %v63, 1
    %v75 = vsel %vm70, %v72, %v74
    %vm76 = vcmask 31744
    %v77 = vsel %vm76, %v73, 0
    %v79 = vsel %vm76, %v75, 0
    %vm81 = vcmask 1043456
    %v83 = vsel %vm81, %v67, 0
    %85 = vmatprep.subr.mxu0 0.0
    %86 = vmatpush1.msra.mxu0 0.0
    %87 = vmatprep.subr.mxu0 0.0
    %88 = vmatpush1.msra.mxu0 0.0
    %89 = vmatprep.subr.mxu0 0.0
    %90 = vmatpush1.msra.mxu0 0.0
    %91 = vmatprep.subr.mxu0 0.0
    %92 = vmatpush1.msra.mxu0 0.0
    %93 = vmatprep.subr.mxu0 0.0
    %94 = vmatpush1.msra.mxu0 0.0
    %95 = vmatprep.subr.mxu0 0.0
    %96 = vmatpush1.msra.mxu0 0.0
    %97 = vmatprep.subr.mxu0 0.0
    %98 = vmatpush1.msra.mxu0 0.0
    %99 = vmatprep.subr.mxu0 0.0
    %100 = vmatpush1.msra.mxu0 0.0
    %101 = vmatprep.subr.mxu0 0.0
    %102 = vmatpush1.msra.mxu0 0.0
    %103 = vmatprep.subr.mxu0 0.0
    %104 = vmatpush1.msra.mxu0 0.0
    %105 = vmatprep.subr.mxu0 0.0
    %106 = vmatpush1.msra.mxu0 0.0
    %107 = vmatprep.subr.mxu0 0.0
    %108 = vmatpush1.msra.mxu0 0.0
    %109 = vmatprep.subr.mxu0 0.0
    %110 = vmatpush1.msra.mxu0 0.0
    %111 = vmatprep.subr.mxu0 0.0
    %112 = vmatpush1.msra.mxu0 0.0
    %113 = vmatprep.subr.mxu0 0.0
    %114 = vmatpush1.msra.mxu0 0.0
    %115 = vmatprep.subr.mxu0 0.0
    %116 = vmatpush1.msra.mxu0 %v83
    %117 = vmatprep.subr.mxu0 0.0
    %118 = vmatpush2.msra.mxu0 0.0
    %119 = vmatprep.subr.mxu0 0.0
    %120 = vmatpush2.msra.mxu0 0.0
    %121 = vmatprep.subr.mxu0 0.0
    %122 = vmatpush2.msra.mxu0 0.0
    %123 = vmatprep.subr.mxu0 0.0
    %124 = vmatpush2.msra.mxu0 0.0
    %125 = vmatprep.subr.mxu0 0.0
    %126 = vmatpush2.msra.mxu0 0.0
    %127 = vmatprep.subr.mxu0 0.0
    %128 = vmatpush2.msra.mxu0 0.0
    %129 = vmatprep.subr.mxu0 0.0
    %130 = vmatpush2.msra.mxu0 0.0
    %131 = vmatprep.subr.mxu0 0.0
    %132 = vmatpush2.msra.mxu0 0.0
    %133 = vmatprep.subr.mxu0 0.0
    %134 = vmatpush2.msra.mxu0 0.0
    %135 = vmatprep.subr.mxu0 0.0
    %136 = vmatpush2.msra.mxu0 0.0
    %137 = vmatprep.subr.mxu0 0.0
    %138 = vmatpush2.msra.mxu0 0.0
    %139 = vmatprep.subr.mxu0 0.0
    %140 = vmatpush2.msra.mxu0 0.0
    %141 = vmatprep.subr.mxu0 0.0
    %142 = vmatpush2.msra.mxu0 0.0
    %143 = vmatprep.subr.mxu0 0.0
    %144 = vmatpush2.msra.mxu0 0.0
    %145 = vmatprep.subr.mxu0 0.0
    %146 = vmatpush2.msra.mxu0 0.0
    %147 = vmatprep.subr.mxu0 0.0
    %148 = vmatpush2.msra.mxu0 0.0
    %149 = vmatprep.mubr.f32.mxu0 0.0
    %150 = vmatmul.mubr.f32.gmra.mxu0 %v77
    %v151 = vpop.f32.mrf.mxu0
    %v152 = vadd.f32 0.0, %v151
    %v153 = vpop.f32.mrf.mxu0
    %154 = vmatprep.mubr.f32.mxu0 0.0
    %155 = vmatmul.mubr.f32.gmra.mxu0 %v79
    %v156 = vpop.f32.mrf.mxu0
    %v157 = vadd.f32 0.0, %v156
    %v158 = vpop.f32.mrf.mxu0
    %159 = vdwg.mxu0
    %v162 = vrot.slane %v62, 1
    %v163 = vrot.slane %v56, 1
    %v164 = vsel %vm70, %v162, %v163
    %v165 = vrot.slane %v64, 1
    %v166 = vsel %vm70, %v163, %v165
    %v167 = vsel %vm76, %v164, 0
    %v169 = vsel %vm76, %v166, 0
    %171 = vmatprep.subr.mxu0 0.0
    %172 = vmatpush1.msra.mxu0 0.0
    %173 = vmatprep.subr.mxu0 0.0
    %174 = vmatpush1.msra.mxu0 0.0
    %175 = vmatprep.subr.mxu0 0.0
    %176 = vmatpush1.msra.mxu0 0.0
    %177 = vmatprep.subr.mxu0 0.0
    %178 = vmatpush1.msra.mxu0 0.0
    %179 = vmatprep.subr.mxu0 0.0
    %180 = vmatpush1.msra.mxu0 0.0
    %181 = vmatprep.subr.mxu0 0.0
    %182 = vmatpush1.msra.mxu0 0.0
    %183 = vmatprep.subr.mxu0 0.0
    %184 = vmatpush1.msra.mxu0 0.0
    %185 = vmatprep.subr.mxu0 0.0
    %186 = vmatpush1.msra.mxu0 0.0
    %187 = vmatprep.subr.mxu0 0.0
    %188 = vmatpush1.msra.mxu0 0.0
    %189 = vmatprep.subr.mxu0 0.0
    %190 = vmatpush1.msra.mxu0 0.0
    %191 = vmatprep.subr.mxu0 0.0
    %192 = vmatpush1.msra.mxu0 0.0
    %193 = vmatprep.subr.mxu0 0.0
    %194 = vmatpush1.msra.mxu0 0.0
    %195 = vmatprep.subr.mxu0 0.0
    %196 = vmatpush1.msra.mxu0 0.0
    %197 = vmatprep.subr.mxu0 0.0
    %198 = vmatpush1.msra.mxu0 0.0
    %199 = vmatprep.subr.mxu0 0.0
    %200 = vmatpush1.msra.mxu0 0.0
    %201 = vmatprep.subr.mxu0 0.0
    %202 = vmatpush1.msra.mxu0 %v83
    %203 = vmatprep.subr.mxu0 0.0
    %204 = vmatpush2.msra.mxu0 0.0
    %205 = vmatprep.subr.mxu0 0.0
    %206 = vmatpush2.msra.mxu0 0.0
    %207 = vmatprep.subr.mxu0 0.0
    %208 = vmatpush2.msra.mxu0 0.0
    %209 = vmatprep.subr.mxu0 0.0
    %210 = vmatpush2.msra.mxu0 0.0
    %211 = vmatprep.subr.mxu0 0.0
    %212 = vmatpush2.msra.mxu0 0.0
    %213 = vmatprep.subr.mxu0 0.0
    %214 = vmatpush2.msra.mxu0 0.0
    %215 = vmatprep.subr.mxu0 0.0
    %216 = vmatpush2.msra.mxu0 0.0
    %217 = vmatprep.subr.mxu0 0.0
    %218 = vmatpush2.msra.mxu0 0.0
    %219 = vmatprep.subr.mxu0 0.0
    %220 = vmatpush2.msra.mxu0 0.0
    %221 = vmatprep.subr.mxu0 0.0
    %222 = vmatpush2.msra.mxu0 0.0
    %223 = vmatprep.subr.mxu0 0.0
    %224 = vmatpush2.msra.mxu0 0.0
    %225 = vmatprep.subr.mxu0 0.0
    %226 = vmatpush2.msra.mxu0 0.0
    %227 = vmatprep.subr.mxu0 0.0
    %228 = vmatpush2.msra.mxu0 0.0
    %229 = vmatprep.subr.mxu0 0.0
    %230 = vmatpush2.msra.mxu0 0.0
    %231 = vmatprep.subr.mxu0 0.0
    %232 = vmatpush2.msra.mxu0 0.0
    %233 = vmatprep.subr.mxu0 0.0
    %234 = vmatpush2.msra.mxu0 0.0
    %235 = vmatprep.mubr.f32.mxu0 0.0
    %236 = vmatmul.mubr.f32.gmra.mxu0 %v167
    %v237 = vpop.f32.mrf.mxu0
    %v238 = vadd.f32 0.0, %v237
    %v239 = vpop.f32.mrf.mxu0
    %240 = vmatprep.mubr.f32.mxu0 0.0
    %241 = vmatmul.mubr.f32.gmra.mxu0 %v169
    %v242 = vpop.f32.mrf.mxu0
    %v243 = vadd.f32 0.0, %v242
    %v244 = vpop.f32.mrf.mxu0
    %245 = vdwg.mxu0
    %v246 = vsel %vm76, %v61, 0
    %v248 = vsel %vm76, %v53, 0
    %v251 = vsel %vm81, %v65, 0
    %253 = vmatprep.subr.mxu0 0.0
    %254 = vmatpush1.msra.mxu0 0.0
    %255 = vmatprep.subr.mxu0 0.0
    %256 = vmatpush1.msra.mxu0 0.0
    %257 = vmatprep.subr.mxu0 0.0
    %258 = vmatpush1.msra.mxu0 0.0
    %259 = vmatprep.subr.mxu0 0.0
    %260 = vmatpush1.msra.mxu0 0.0
    %261 = vmatprep.subr.mxu0 0.0
    %262 = vmatpush1.msra.mxu0 0.0
    %263 = vmatprep.subr.mxu0 0.0
    %264 = vmatpush1.msra.mxu0 0.0
    %265 = vmatprep.subr.mxu0 0.0
    %266 = vmatpush1.msra.mxu0 0.0
    %267 = vmatprep.subr.mxu0 0.0
    %268 = vmatpush1.msra.mxu0 0.0
    %269 = vmatprep.subr.mxu0 0.0
    %270 = vmatpush1.msra.mxu0 0.0
    %271 = vmatprep.subr.mxu0 0.0
    %272 = vmatpush1.msra.mxu0 0.0
    %273 = vmatprep.subr.mxu0 0.0
    %274 = vmatpush1.msra.mxu0 0.0
    %275 = vmatprep.subr.mxu0 0.0
    %276 = vmatpush1.msra.mxu0 0.0
    %277 = vmatprep.subr.mxu0 0.0
    %278 = vmatpush1.msra.mxu0 0.0
    %279 = vmatprep.subr.mxu0 0.0
    %280 = vmatpush1.msra.mxu0 0.0
    %281 = vmatprep.subr.mxu0 0.0
    %282 = vmatpush1.msra.mxu0 0.0
    %283 = vmatprep.subr.mxu0 0.0
    %284 = vmatpush1.msra.mxu0 %v251
    %285 = vmatprep.subr.mxu0 0.0
    %286 = vmatpush2.msra.mxu0 0.0
    %287 = vmatprep.subr.mxu0 0.0
    %288 = vmatpush2.msra.mxu0 0.0
    %289 = vmatprep.subr.mxu0 0.0
    %290 = vmatpush2.msra.mxu0 0.0
    %291 = vmatprep.subr.mxu0 0.0
    %292 = vmatpush2.msra.mxu0 0.0
    %293 = vmatprep.subr.mxu0 0.0
    %294 = vmatpush2.msra.mxu0 0.0
    %295 = vmatprep.subr.mxu0 0.0
    %296 = vmatpush2.msra.mxu0 0.0
    %297 = vmatprep.subr.mxu0 0.0
    %298 = vmatpush2.msra.mxu0 0.0
    %299 = vmatprep.subr.mxu0 0.0
    %300 = vmatpush2.msra.mxu0 0.0
    %301 = vmatprep.subr.mxu0 0.0
    %302 = vmatpush2.msra.mxu0 0.0
    %303 = vmatprep.subr.mxu0 0.0
    %304 = vmatpush2.msra.mxu0 0.0
    %305 = vmatprep.subr.mxu0 0.0
    %306 = vmatpush2.msra.mxu0 0.0
    %307 = vmatprep.subr.mxu0 0.0
    %308 = vmatpush2.msra.mxu0 0.0
    %309 = vmatprep.subr.mxu0 0.0
    %310 = vmatpush2.msra.mxu0 0.0
    %311 = vmatprep.subr.mxu0 0.0
    %312 = vmatpush2.msra.mxu0 0.0
    %313 = vmatprep.subr.mxu0 0.0
    %314 = vmatpush2.msra.mxu0 0.0
    %315 = vmatprep.subr.mxu0 0.0
    %316 = vmatpush2.msra.mxu0 0.0
    %317 = vmatprep.mubr.f32.mxu0 0.0
    %318 = vmatmul.mubr.f32.gmra.mxu0 %v246
    %v319 = vpop.f32.mrf.mxu0
    %v320 = vadd.f32 %v152, %v319
    %v321 = vpop.f32.mrf.mxu0
    %322 = vmatprep.mubr.f32.mxu0 0.0
    %323 = vmatmul.mubr.f32.gmra.mxu0 %v248
    %v324 = vpop.f32.mrf.mxu0
    %v325 = vadd.f32 %v157, %v324
    %v326 = vpop.f32.mrf.mxu0
    %327 = vdwg.mxu0
    %v328 = vsel %vm76, %v62, 0
    %v330 = vsel %vm76, %v56, 0
    %332 = vmatprep.subr.mxu0 0.0
    %333 = vmatpush1.msra.mxu0 0.0
    %334 = vmatprep.subr.mxu0 0.0
    %335 = vmatpush1.msra.mxu0 0.0
    %336 = vmatprep.subr.mxu0 0.0
    %337 = vmatpush1.msra.mxu0 0.0
    %338 = vmatprep.subr.mxu0 0.0
    %339 = vmatpush1.msra.mxu0 0.0
    %340 = vmatprep.subr.mxu0 0.0
    %341 = vmatpush1.msra.mxu0 0.0
    %342 = vmatprep.subr.mxu0 0.0
    %343 = vmatpush1.msra.mxu0 0.0
    %344 = vmatprep.subr.mxu0 0.0
    %345 = vmatpush1.msra.mxu0 0.0
    %346 = vmatprep.subr.mxu0 0.0
    %347 = vmatpush1.msra.mxu0 0.0
    %348 = vmatprep.subr.mxu0 0.0
    %349 = vmatpush1.msra.mxu0 0.0
    %350 = vmatprep.subr.mxu0 0.0
    %351 = vmatpush1.msra.mxu0 0.0
    %352 = vmatprep.subr.mxu0 0.0
    %353 = vmatpush1.msra.mxu0 0.0
    %354 = vmatprep.subr.mxu0 0.0
    %355 = vmatpush1.msra.mxu0 0.0
    %356 = vmatprep.subr.mxu0 0.0
    %357 = vmatpush1.msra.mxu0 0.0
    %358 = vmatprep.subr.mxu0 0.0
    %359 = vmatpush1.msra.mxu0 0.0
    %360 = vmatprep.subr.mxu0 0.0
    %361 = vmatpush1.msra.mxu0 0.0
    %362 = vmatprep.subr.mxu0 0.0
    %363 = vmatpush1.msra.mxu0 %v251
    %364 = vmatprep.subr.mxu0 0.0
    %365 = vmatpush2.msra.mxu0 0.0
    %366 = vmatprep.subr.mxu0 0.0
    %367 = vmatpush2.msra.mxu0 0.0
    %368 = vmatprep.subr.mxu0 0.0
    %369 = vmatpush2.msra.mxu0 0.0
    %370 = vmatprep.subr.mxu0 0.0
    %371 = vmatpush2.msra.mxu0 0.0
    %372 = vmatprep.subr.mxu0 0.0
    %373 = vmatpush2.msra.mxu0 0.0
    %374 = vmatprep.subr.mxu0 0.0
    %375 = vmatpush2.msra.mxu0 0.0
    %376 = vmatprep.subr.mxu0 0.0
    %377 = vmatpush2.msra.mxu0 0.0
    %378 = vmatprep.subr.mxu0 0.0
    %379 = vmatpush2.msra.mxu0 0.0
    %380 = vmatprep.subr.mxu0 0.0
    %381 = vmatpush2.msra.mxu0 0.0
    %382 = vmatprep.subr.mxu0 0.0
    %383 = vmatpush2.msra.mxu0 0.0
    %384 = vmatprep.subr.mxu0 0.0
    %385 = vmatpush2.msra.mxu0 0.0
    %386 = vmatprep.subr.mxu0 0.0
    %387 = vmatpush2.msra.mxu0 0.0
    %388 = vmatprep.subr.mxu0 0.0
    %389 = vmatpush2.msra.mxu0 0.0
    %390 = vmatprep.subr.mxu0 0.0
    %391 = vmatpush2.msra.mxu0 0.0
    %392 = vmatprep.subr.mxu0 0.0
    %393 = vmatpush2.msra.mxu0 0.0
    %394 = vmatprep.subr.mxu0 0.0
    %395 = vmatpush2.msra.mxu0 0.0
    %396 = vmatprep.mubr.f32.mxu0 0.0
    %397 = vmatmul.mubr.f32.gmra.mxu0 %v328
    %v398 = vpop.f32.mrf.mxu0
    %v399 = vadd.f32 %v238, %v398
    %v400 = vpop.f32.mrf.mxu0
    %401 = vmatprep.mubr.f32.mxu0 0.0
    %402 = vmatmul.mubr.f32.gmra.mxu0 %v330
    %v403 = vpop.f32.mrf.mxu0
    %v404 = vadd.f32 %v243, %v403
    %v405 = vpop.f32.mrf.mxu0
    %406 = vdwg.mxu0
    %s407 = scalar_lea.vmem %s1, 8
    %v408 = vld [vmem:[%s407] sm:$0xf]
    %vm409 = vcmask 1045504
    %v410 = vrot.slane %v61, 2
    %v411 = vrot.slane %v53, 2
    %v412 = vsel %vm409, %v410, %v411
    %v413 = vrot.slane %v63, 2
    %v414 = vsel %vm409, %v411, %v413
    %v415 = vsel %vm76, %v412, 0
    %v417 = vsel %vm76, %v414, 0
    %v420 = vsel %vm81, %v408, 0
    %422 = vmatprep.subr.mxu0 0.0
    %423 = vmatpush1.msra.mxu0 0.0
    %424 = vmatprep.subr.mxu0 0.0
    %425 = vmatpush1.msra.mxu0 0.0
    %426 = vmatprep.subr.mxu0 0.0
    %427 = vmatpush1.msra.mxu0 0.0
    %428 = vmatprep.subr.mxu0 0.0
    %429 = vmatpush1.msra.mxu0 0.0
    %430 = vmatprep.subr.mxu0 0.0
    %431 = vmatpush1.msra.mxu0 0.0
    %432 = vmatprep.subr.mxu0 0.0
    %433 = vmatpush1.msra.mxu0 0.0
    %434 = vmatprep.subr.mxu0 0.0
    %435 = vmatpush1.msra.mxu0 0.0
    %436 = vmatprep.subr.mxu0 0.0
    %437 = vmatpush1.msra.mxu0 0.0
    %438 = vmatprep.subr.mxu0 0.0
    %439 = vmatpush1.msra.mxu0 0.0
    %440 = vmatprep.subr.mxu0 0.0
    %441 = vmatpush1.msra.mxu0 0.0
    %442 = vmatprep.subr.mxu0 0.0
    %443 = vmatpush1.msra.mxu0 0.0
    %444 = vmatprep.subr.mxu0 0.0
    %445 = vmatpush1.msra.mxu0 0.0
    %446 = vmatprep.subr.mxu0 0.0
    %447 = vmatpush1.msra.mxu0 0.0
    %448 = vmatprep.subr.mxu0 0.0
    %449 = vmatpush1.msra.mxu0 0.0
    %450 = vmatprep.subr.mxu0 0.0
    %451 = vmatpush1.msra.mxu0 0.0
    %452 = vmatprep.subr.mxu0 0.0
    %453 = vmatpush1.msra.mxu0 %v420
    %454 = vmatprep.subr.mxu0 0.0
    %455 = vmatpush2.msra.mxu0 0.0
    %456 = vmatprep.subr.mxu0 0.0
    %457 = vmatpush2.msra.mxu0 0.0
    %458 = vmatprep.subr.mxu0 0.0
    %459 = vmatpush2.msra.mxu0 0.0
    %460 = vmatprep.subr.mxu0 0.0
    %461 = vmatpush2.msra.mxu0 0.0
    %462 = vmatprep.subr.mxu0 0.0
    %463 = vmatpush2.msra.mxu0 0.0
    %464 = vmatprep.subr.mxu0 0.0
    %465 = vmatpush2.msra.mxu0 0.0
    %466 = vmatprep.subr.mxu0 0.0
    %467 = vmatpush2.msra.mxu0 0.0
    %468 = vmatprep.subr.mxu0 0.0
    %469 = vmatpush2.msra.mxu0 0.0
    %470 = vmatprep.subr.mxu0 0.0
    %471 = vmatpush2.msra.mxu0 0.0
    %472 = vmatprep.subr.mxu0 0.0
    %473 = vmatpush2.msra.mxu0 0.0
    %474 = vmatprep.subr.mxu0 0.0
    %475 = vmatpush2.msra.mxu0 0.0
    %476 = vmatprep.subr.mxu0 0.0
    %477 = vmatpush2.msra.mxu0 0.0
    %478 = vmatprep.subr.mxu0 0.0
    %479 = vmatpush2.msra.mxu0 0.0
    %480 = vmatprep.subr.mxu0 0.0
    %481 = vmatpush2.msra.mxu0 0.0
    %482 = vmatprep.subr.mxu0 0.0
    %483 = vmatpush2.msra.mxu0 0.0
    %484 = vmatprep.subr.mxu0 0.0
    %485 = vmatpush2.msra.mxu0 0.0
    %486 = vmatprep.mubr.f32.mxu0 0.0
    %487 = vmatmul.mubr.f32.gmra.mxu0 %v415
    %v488 = vpop.f32.mrf.mxu0
    %v489 = vadd.f32 0.0, %v488
    %v490 = vpop.f32.mrf.mxu0
    %491 = vmatprep.mubr.f32.mxu0 0.0
    %492 = vmatmul.mubr.f32.gmra.mxu0 %v417
    %v493 = vpop.f32.mrf.mxu0
    %v494 = vadd.f32 0.0, %v493
    %v495 = vpop.f32.mrf.mxu0
    %496 = vdwg.mxu0
    %v497 = vrot.slane %v62, 2
    %v498 = vrot.slane %v56, 2
    %v499 = vsel %vm409, %v497, %v498
    %v500 = vrot.slane %v64, 2
    %v501 = vsel %vm409, %v498, %v500
    %v502 = vsel %vm76, %v499, 0
    %v504 = vsel %vm76, %v501, 0
    %506 = vmatprep.subr.mxu0 0.0
    %507 = vmatpush1.msra.mxu0 0.0
    %508 = vmatprep.subr.mxu0 0.0
    %509 = vmatpush1.msra.mxu0 0.0
    %510 = vmatprep.subr.mxu0 0.0
    %511 = vmatpush1.msra.mxu0 0.0
    %512 = vmatprep.subr.mxu0 0.0
    %513 = vmatpush1.msra.mxu0 0.0
    %514 = vmatprep.subr.mxu0 0.0
    %515 = vmatpush1.msra.mxu0 0.0
    %516 = vmatprep.subr.mxu0 0.0
    %517 = vmatpush1.msra.mxu0 0.0
    %518 = vmatprep.subr.mxu0 0.0
    %519 = vmatpush1.msra.mxu0 0.0
    %520 = vmatprep.subr.mxu0 0.0
    %521 = vmatpush1.msra.mxu0 0.0
    %522 = vmatprep.subr.mxu0 0.0
    %523 = vmatpush1.msra.mxu0 0.0
    %524 = vmatprep.subr.mxu0 0.0
    %525 = vmatpush1.msra.mxu0 0.0
    %526 = vmatprep.subr.mxu0 0.0
    %527 = vmatpush1.msra.mxu0 0.0
    %528 = vmatprep.subr.mxu0 0.0
    %529 = vmatpush1.msra.mxu0 0.0
    %530 = vmatprep.subr.mxu0 0.0
    %531 = vmatpush1.msra.mxu0 0.0
    %532 = vmatprep.subr.mxu0 0.0
    %533 = vmatpush1.msra.mxu0 0.0
    %534 = vmatprep.subr.mxu0 0.0
    %535 = vmatpush1.msra.mxu0 0.0
    %536 = vmatprep.subr.mxu0 0.0
    %537 = vmatpush1.msra.mxu0 %v420
    %538 = vmatprep.subr.mxu0 0.0
    %539 = vmatpush2.msra.mxu0 0.0
    %540 = vmatprep.subr.mxu0 0.0
    %541 = vmatpush2.msra.mxu0 0.0
    %542 = vmatprep.subr.mxu0 0.0
    %543 = vmatpush2.msra.mxu0 0.0
    %544 = vmatprep.subr.mxu0 0.0
    %545 = vmatpush2.msra.mxu0 0.0
    %546 = vmatprep.subr.mxu0 0.0
    %547 = vmatpush2.msra.mxu0 0.0
    %548 = vmatprep.subr.mxu0 0.0
    %549 = vmatpush2.msra.mxu0 0.0
    %550 = vmatprep.subr.mxu0 0.0
    %551 = vmatpush2.msra.mxu0 0.0
    %552 = vmatprep.subr.mxu0 0.0
    %553 = vmatpush2.msra.mxu0 0.0
    %554 = vmatprep.subr.mxu0 0.0
    %555 = vmatpush2.msra.mxu0 0.0
    %556 = vmatprep.subr.mxu0 0.0
    %557 = vmatpush2.msra.mxu0 0.0
    %558 = vmatprep.subr.mxu0 0.0
    %559 = vmatpush2.msra.mxu0 0.0
    %560 = vmatprep.subr.mxu0 0.0
    %561 = vmatpush2.msra.mxu0 0.0
    %562 = vmatprep.subr.mxu0 0.0
    %563 = vmatpush2.msra.mxu0 0.0
    %564 = vmatprep.subr.mxu0 0.0
    %565 = vmatpush2.msra.mxu0 0.0
    %566 = vmatprep.subr.mxu0 0.0
    %567 = vmatpush2.msra.mxu0 0.0
    %568 = vmatprep.subr.mxu0 0.0
    %569 = vmatpush2.msra.mxu0 0.0
    %570 = vmatprep.mubr.f32.mxu0 0.0
    %571 = vmatmul.mubr.f32.gmra.mxu0 %v502
    %v572 = vpop.f32.mrf.mxu0
    %v573 = vadd.f32 0.0, %v572
    %v574 = vpop.f32.mrf.mxu0
    %575 = vmatprep.mubr.f32.mxu0 0.0
    %576 = vmatmul.mubr.f32.gmra.mxu0 %v504
    %v577 = vpop.f32.mrf.mxu0
    %v578 = vadd.f32 0.0, %v577
    %v579 = vpop.f32.mrf.mxu0
    %580 = vdwg.mxu0
    %v581 = vadd.f32 %v320, %v489
    %v582 = vadd.f32 %v325, %v494
    %v583 = vadd.f32 %v399, %v573
    %v584 = vadd.f32 %v404, %v578
    %v585 = vld [vmem:[%s2] sm:$0x1]
    %v587 = vlaneseq
    %v588 = vshrl.u32 %v587, 7
    %v589 = vsub.s32 0, %v588
    %v590 = vrot.slane %v585, %v589
    %v592 = vadd.f32 %v581, %v590
    %v593 = vadd.f32 %v582, %v590
    %v594 = vadd.f32 %v583, %v590
    %v595 = vadd.f32 %v584, %v590
    %v596 = vmax.f32 %v592, 0.0
    %v597 = vmax.f32 %v593, 0.0
    %v598 = vmax.f32 %v594, 0.0
    %v599 = vmax.f32 %v595, 0.0
    %v602 = vrot.slane %v596, 1
    %v603 = vrot.slane %v598, 1
    %v606 = vmax.f32 %v596, %v602
    %v607 = vmax.f32 %v598, %v603
    %v610 = vrot.slane %v597, 1
    %v611 = vrot.slane %v599, 1
    %v614 = vmax.f32 %v597, %v610
    %v615 = vmax.f32 %v599, %v611
    %v618 = vrot.slane %v606, 1
    %v619 = vrot.slane %v607, 1
    %v622 = vrot.slane %v606, 2
    %v623 = vrot.slane %v607, 2
    %v626 = vrot.slane %v606, 3
    %v627 = vrot.slane %v607, 3
    %v632 = vrot.slane %v614, 4
    %v633 = vrot.slane %v615, 4
    %v636 = vrot.slane %v614, 5
    %v637 = vrot.slane %v615, 5
    %v640 = vrot.slane %v614, 6
    %v641 = vrot.slane %v615, 6
    %v644 = vrot.slane %v614, 7
    %v645 = vrot.slane %v615, 7
    %v648 = vsel %vm50, %v606, %v618
    %v649 = vsel %vm50, %v607, %v619
    %vm650 = vcmask 1041408
    %v651 = vsel %vm650, %v648, %v622
    %v652 = vsel %vm650, %v649, %v623
    %vm653 = vcmask 1042432
    %v654 = vsel %vm653, %v651, %v626
    %v655 = vsel %vm653, %v652, %v627
    %v656 = vsel %vm81, %v654, %v632
    %v657 = vsel %vm81, %v655, %v633
    %vm658 = vcmask 1044480
    %v659 = vsel %vm658, %v656, %v636
    %v660 = vsel %vm658, %v657, %v637
    %v661 = vsel %vm409, %v659, %v640
    %v662 = vsel %vm409, %v660, %v641
    %v663 = vsel %vm70, %v661, %v644
    %v664 = vsel %vm70, %v662, %v645
    %v667 = vrot.slane %v663, 7
    %v668 = vrot.slane %v664, 7
    %v671 = vsel %vm50, 0.0, %v667
    %v672 = vsel %vm50, 0.0, %v668
    %v673 = vsel %vm50, %v667, 0.0
    %v674 = vsel %vm50, %v668, 0.0
    %v675 = vld [vmem:[%s3] sm:$0xff]
    %s676 = scalar_lea.vmem %s3, 8
    %v677 = vld [vmem:[%s676] sm:$0xff]
    %v680 = vrot.slane %v671, 1
    %v681 = vrot.slane %v673, 1
    %v682 = vsel %vm70, %v680, %v681
    %vm683 = vcmask 64512
    %v684 = vsel %vm683, %v682, 0
    %686 = vmatprep.subr.mxu0 0.0
    %687 = vmatpush1.msra.mxu0 0.0
    %688 = vmatprep.subr.mxu0 0.0
    %689 = vmatpush1.msra.mxu0 0.0
    %690 = vmatprep.subr.mxu0 0.0
    %691 = vmatpush1.msra.mxu0 0.0
    %692 = vmatprep.subr.mxu0 0.0
    %693 = vmatpush1.msra.mxu0 0.0
    %694 = vmatprep.subr.mxu0 0.0
    %695 = vmatpush1.msra.mxu0 0.0
    %696 = vmatprep.subr.mxu0 0.0
    %697 = vmatpush1.msra.mxu0 0.0
    %698 = vmatprep.subr.mxu0 0.0
    %699 = vmatpush1.msra.mxu0 0.0
    %700 = vmatprep.subr.mxu0 0.0
    %701 = vmatpush1.msra.mxu0 0.0
    %702 = vmatprep.subr.mxu0 0.0
    %703 = vmatpush1.msra.mxu0 0.0
    %704 = vmatprep.subr.mxu0 0.0
    %705 = vmatpush1.msra.mxu0 0.0
    %706 = vmatprep.subr.mxu0 0.0
    %707 = vmatpush1.msra.mxu0 0.0
    %708 = vmatprep.subr.mxu0 0.0
    %709 = vmatpush1.msra.mxu0 0.0
    %710 = vmatprep.subr.mxu0 0.0
    %711 = vmatpush1.msra.mxu0 0.0
    %712 = vmatprep.subr.mxu0 0.0
    %713 = vmatpush1.msra.mxu0 0.0
    %714 = vmatprep.subr.mxu0 0.0
    %715 = vmatpush1.msra.mxu0 0.0
    %716 = vmatprep.subr.mxu0 0.0
    %717 = vmatpush1.msra.mxu0 %v677
    %718 = vmatprep.subr.mxu0 0.0
    %719 = vmatpush2.msra.mxu0 0.0
    %720 = vmatprep.subr.mxu0 0.0
    %721 = vmatpush2.msra.mxu0 0.0
    %722 = vmatprep.subr.mxu0 0.0
    %723 = vmatpush2.msra.mxu0 0.0
    %724 = vmatprep.subr.mxu0 0.0
    %725 = vmatpush2.msra.mxu0 0.0
    %726 = vmatprep.subr.mxu0 0.0
    %727 = vmatpush2.msra.mxu0 0.0
    %728 = vmatprep.subr.mxu0 0.0
    %729 = vmatpush2.msra.mxu0 0.0
    %730 = vmatprep.subr.mxu0 0.0
    %731 = vmatpush2.msra.mxu0 0.0
    %732 = vmatprep.subr.mxu0 0.0
    %733 = vmatpush2.msra.mxu0 0.0
    %734 = vmatprep.subr.mxu0 0.0
    %735 = vmatpush2.msra.mxu0 0.0
    %736 = vmatprep.subr.mxu0 0.0
    %737 = vmatpush2.msra.mxu0 0.0
    %738 = vmatprep.subr.mxu0 0.0
    %739 = vmatpush2.msra.mxu0 0.0
    %740 = vmatprep.subr.mxu0 0.0
    %741 = vmatpush2.msra.mxu0 0.0
    %742 = vmatprep.subr.mxu0 0.0
    %743 = vmatpush2.msra.mxu0 0.0
    %744 = vmatprep.subr.mxu0 0.0
    %745 = vmatpush2.msra.mxu0 0.0
    %746 = vmatprep.subr.mxu0 0.0
    %747 = vmatpush2.msra.mxu0 0.0
    %748 = vmatprep.subr.mxu0 0.0
    %749 = vmatpush2.msra.mxu0 0.0
    %750 = vmatprep.mubr.f32.mxu0 0.0
    %751 = vmatmul.mubr.f32.gmra.mxu0 %v684
    %v752 = vpop.f32.mrf.mxu0
    %v753 = vadd.f32 0.0, %v752
    %v754 = vpop.f32.mrf.mxu0
    %755 = vdwg.mxu0
    %v758 = vrot.slane %v672, 1
    %v759 = vrot.slane %v674, 1
    %v760 = vsel %vm70, %v758, %v759
    %v761 = vsel %vm683, %v760, 0
    %763 = vmatprep.subr.mxu0 0.0
    %764 = vmatpush1.msra.mxu0 0.0
    %765 = vmatprep.subr.mxu0 0.0
    %766 = vmatpush1.msra.mxu0 0.0
    %767 = vmatprep.subr.mxu0 0.0
    %768 = vmatpush1.msra.mxu0 0.0
    %769 = vmatprep.subr.mxu0 0.0
    %770 = vmatpush1.msra.mxu0 0.0
    %771 = vmatprep.subr.mxu0 0.0
    %772 = vmatpush1.msra.mxu0 0.0
    %773 = vmatprep.subr.mxu0 0.0
    %774 = vmatpush1.msra.mxu0 0.0
    %775 = vmatprep.subr.mxu0 0.0
    %776 = vmatpush1.msra.mxu0 0.0
    %777 = vmatprep.subr.mxu0 0.0
    %778 = vmatpush1.msra.mxu0 0.0
    %779 = vmatprep.subr.mxu0 0.0
    %780 = vmatpush1.msra.mxu0 0.0
    %781 = vmatprep.subr.mxu0 0.0
    %782 = vmatpush1.msra.mxu0 0.0
    %783 = vmatprep.subr.mxu0 0.0
    %784 = vmatpush1.msra.mxu0 0.0
    %785 = vmatprep.subr.mxu0 0.0
    %786 = vmatpush1.msra.mxu0 0.0
    %787 = vmatprep.subr.mxu0 0.0
    %788 = vmatpush1.msra.mxu0 0.0
    %789 = vmatprep.subr.mxu0 0.0
    %790 = vmatpush1.msra.mxu0 0.0
    %791 = vmatprep.subr.mxu0 0.0
    %792 = vmatpush1.msra.mxu0 0.0
    %793 = vmatprep.subr.mxu0 0.0
    %794 = vmatpush1.msra.mxu0 %v677
    %795 = vmatprep.subr.mxu0 0.0
    %796 = vmatpush2.msra.mxu0 0.0
    %797 = vmatprep.subr.mxu0 0.0
    %798 = vmatpush2.msra.mxu0 0.0
    %799 = vmatprep.subr.mxu0 0.0
    %800 = vmatpush2.msra.mxu0 0.0
    %801 = vmatprep.subr.mxu0 0.0
    %802 = vmatpush2.msra.mxu0 0.0
    %803 = vmatprep.subr.mxu0 0.0
    %804 = vmatpush2.msra.mxu0 0.0
    %805 = vmatprep.subr.mxu0 0.0
    %806 = vmatpush2.msra.mxu0 0.0
    %807 = vmatprep.subr.mxu0 0.0
    %808 = vmatpush2.msra.mxu0 0.0
    %809 = vmatprep.subr.mxu0 0.0
    %810 = vmatpush2.msra.mxu0 0.0
    %811 = vmatprep.subr.mxu0 0.0
    %812 = vmatpush2.msra.mxu0 0.0
    %813 = vmatprep.subr.mxu0 0.0
    %814 = vmatpush2.msra.mxu0 0.0
    %815 = vmatprep.subr.mxu0 0.0
    %816 = vmatpush2.msra.mxu0 0.0
    %817 = vmatprep.subr.mxu0 0.0
    %818 = vmatpush2.msra.mxu0 0.0
    %819 = vmatprep.subr.mxu0 0.0
    %820 = vmatpush2.msra.mxu0 0.0
    %821 = vmatprep.subr.mxu0 0.0
    %822 = vmatpush2.msra.mxu0 0.0
    %823 = vmatprep.subr.mxu0 0.0
    %824 = vmatpush2.msra.mxu0 0.0
    %825 = vmatprep.subr.mxu0 0.0
    %826 = vmatpush2.msra.mxu0 0.0
    %827 = vmatprep.mubr.f32.mxu0 0.0
    %828 = vmatmul.mubr.f32.gmra.mxu0 %v761
    %v829 = vpop.f32.mrf.mxu0
    %v830 = vadd.f32 0.0, %v829
    %v831 = vpop.f32.mrf.mxu0
    %832 = vdwg.mxu0
    %v833 = vsel %vm683, %v671, 0
    %835 = vmatprep.subr.mxu0 0.0
    %836 = vmatpush1.msra.mxu0 0.0
    %837 = vmatprep.subr.mxu0 0.0
    %838 = vmatpush1.msra.mxu0 0.0
    %839 = vmatprep.subr.mxu0 0.0
    %840 = vmatpush1.msra.mxu0 0.0
    %841 = vmatprep.subr.mxu0 0.0
    %842 = vmatpush1.msra.mxu0 0.0
    %843 = vmatprep.subr.mxu0 0.0
    %844 = vmatpush1.msra.mxu0 0.0
    %845 = vmatprep.subr.mxu0 0.0
    %846 = vmatpush1.msra.mxu0 0.0
    %847 = vmatprep.subr.mxu0 0.0
    %848 = vmatpush1.msra.mxu0 0.0
    %849 = vmatprep.subr.mxu0 0.0
    %850 = vmatpush1.msra.mxu0 0.0
    %851 = vmatprep.subr.mxu0 0.0
    %852 = vmatpush1.msra.mxu0 0.0
    %853 = vmatprep.subr.mxu0 0.0
    %854 = vmatpush1.msra.mxu0 0.0
    %855 = vmatprep.subr.mxu0 0.0
    %856 = vmatpush1.msra.mxu0 0.0
    %857 = vmatprep.subr.mxu0 0.0
    %858 = vmatpush1.msra.mxu0 0.0
    %859 = vmatprep.subr.mxu0 0.0
    %860 = vmatpush1.msra.mxu0 0.0
    %861 = vmatprep.subr.mxu0 0.0
    %862 = vmatpush1.msra.mxu0 0.0
    %863 = vmatprep.subr.mxu0 0.0
    %864 = vmatpush1.msra.mxu0 0.0
    %865 = vmatprep.subr.mxu0 0.0
    %866 = vmatpush1.msra.mxu0 %v675
    %867 = vmatprep.subr.mxu0 0.0
    %868 = vmatpush2.msra.mxu0 0.0
    %869 = vmatprep.subr.mxu0 0.0
    %870 = vmatpush2.msra.mxu0 0.0
    %871 = vmatprep.subr.mxu0 0.0
    %872 = vmatpush2.msra.mxu0 0.0
    %873 = vmatprep.subr.mxu0 0.0
    %874 = vmatpush2.msra.mxu0 0.0
    %875 = vmatprep.subr.mxu0 0.0
    %876 = vmatpush2.msra.mxu0 0.0
    %877 = vmatprep.subr.mxu0 0.0
    %878 = vmatpush2.msra.mxu0 0.0
    %879 = vmatprep.subr.mxu0 0.0
    %880 = vmatpush2.msra.mxu0 0.0
    %881 = vmatprep.subr.mxu0 0.0
    %882 = vmatpush2.msra.mxu0 0.0
    %883 = vmatprep.subr.mxu0 0.0
    %884 = vmatpush2.msra.mxu0 0.0
    %885 = vmatprep.subr.mxu0 0.0
    %886 = vmatpush2.msra.mxu0 0.0
    %887 = vmatprep.subr.mxu0 0.0
    %888 = vmatpush2.msra.mxu0 0.0
    %889 = vmatprep.subr.mxu0 0.0
    %890 = vmatpush2.msra.mxu0 0.0
    %891 = vmatprep.subr.mxu0 0.0
    %892 = vmatpush2.msra.mxu0 0.0
    %893 = vmatprep.subr.mxu0 0.0
    %894 = vmatpush2.msra.mxu0 0.0
    %895 = vmatprep.subr.mxu0 0.0
    %896 = vmatpush2.msra.mxu0 0.0
    %897 = vmatprep.subr.mxu0 0.0
    %898 = vmatpush2.msra.mxu0 0.0
    %899 = vmatprep.mubr.f32.mxu0 0.0
    %900 = vmatmul.mubr.f32.gmra.mxu0 %v833
    %v901 = vpop.f32.mrf.mxu0
    %v902 = vadd.f32 %v753, %v901
    %v903 = vpop.f32.mrf.mxu0
    %904 = vdwg.mxu0
    %v905 = vsel %vm683, %v672, 0
    %907 = vmatprep.subr.mxu0 0.0
    %908 = vmatpush1.msra.mxu0 0.0
    %909 = vmatprep.subr.mxu0 0.0
    %910 = vmatpush1.msra.mxu0 0.0
    %911 = vmatprep.subr.mxu0 0.0
    %912 = vmatpush1.msra.mxu0 0.0
    %913 = vmatprep.subr.mxu0 0.0
    %914 = vmatpush1.msra.mxu0 0.0
    %915 = vmatprep.subr.mxu0 0.0
    %916 = vmatpush1.msra.mxu0 0.0
    %917 = vmatprep.subr.mxu0 0.0
    %918 = vmatpush1.msra.mxu0 0.0
    %919 = vmatprep.subr.mxu0 0.0
    %920 = vmatpush1.msra.mxu0 0.0
    %921 = vmatprep.subr.mxu0 0.0
    %922 = vmatpush1.msra.mxu0 0.0
    %923 = vmatprep.subr.mxu0 0.0
    %924 = vmatpush1.msra.mxu0 0.0
    %925 = vmatprep.subr.mxu0 0.0
    %926 = vmatpush1.msra.mxu0 0.0
    %927 = vmatprep.subr.mxu0 0.0
    %928 = vmatpush1.msra.mxu0 0.0
    %929 = vmatprep.subr.mxu0 0.0
    %930 = vmatpush1.msra.mxu0 0.0
    %931 = vmatprep.subr.mxu0 0.0
    %932 = vmatpush1.msra.mxu0 0.0
    %933 = vmatprep.subr.mxu0 0.0
    %934 = vmatpush1.msra.mxu0 0.0
    %935 = vmatprep.subr.mxu0 0.0
    %936 = vmatpush1.msra.mxu0 0.0
    %937 = vmatprep.subr.mxu0 0.0
    %938 = vmatpush1.msra.mxu0 %v675
    %939 = vmatprep.subr.mxu0 0.0
    %940 = vmatpush2.msra.mxu0 0.0
    %941 = vmatprep.subr.mxu0 0.0
    %942 = vmatpush2.msra.mxu0 0.0
    %943 = vmatprep.subr.mxu0 0.0
    %944 = vmatpush2.msra.mxu0 0.0
    %945 = vmatprep.subr.mxu0 0.0
    %946 = vmatpush2.msra.mxu0 0.0
    %947 = vmatprep.subr.mxu0 0.0
    %948 = vmatpush2.msra.mxu0 0.0
    %949 = vmatprep.subr.mxu0 0.0
    %950 = vmatpush2.msra.mxu0 0.0
    %951 = vmatprep.subr.mxu0 0.0
    %952 = vmatpush2.msra.mxu0 0.0
    %953 = vmatprep.subr.mxu0 0.0
    %954 = vmatpush2.msra.mxu0 0.0
    %955 = vmatprep.subr.mxu0 0.0
    %956 = vmatpush2.msra.mxu0 0.0
    %957 = vmatprep.subr.mxu0 0.0
    %958 = vmatpush2.msra.mxu0 0.0
    %959 = vmatprep.subr.mxu0 0.0
    %960 = vmatpush2.msra.mxu0 0.0
    %961 = vmatprep.subr.mxu0 0.0
    %962 = vmatpush2.msra.mxu0 0.0
    %963 = vmatprep.subr.mxu0 0.0
    %964 = vmatpush2.msra.mxu0 0.0
    %965 = vmatprep.subr.mxu0 0.0
    %966 = vmatpush2.msra.mxu0 0.0
    %967 = vmatprep.subr.mxu0 0.0
    %968 = vmatpush2.msra.mxu0 0.0
    %969 = vmatprep.subr.mxu0 0.0
    %970 = vmatpush2.msra.mxu0 0.0
    %971 = vmatprep.mubr.f32.mxu0 0.0
    %972 = vmatmul.mubr.f32.gmra.mxu0 %v905
    %v973 = vpop.f32.mrf.mxu0
    %v974 = vadd.f32 %v830, %v973
    %v975 = vpop.f32.mrf.mxu0
    %976 = vdwg.mxu0
    %s977 = scalar_lea.vmem %s3, 16
    %v978 = vld [vmem:[%s977] sm:$0xff]
    %v979 = vrot.slane %v671, 2
    %v980 = vrot.slane %v673, 2
    %v981 = vsel %vm409, %v979, %v980
    %v982 = vsel %vm683, %v981, 0
    %984 = vmatprep.subr.mxu0 0.0
    %985 = vmatpush1.msra.mxu0 0.0
    %986 = vmatprep.subr.mxu0 0.0
    %987 = vmatpush1.msra.mxu0 0.0
    %988 = vmatprep.subr.mxu0 0.0
    %989 = vmatpush1.msra.mxu0 0.0
    %990 = vmatprep.subr.mxu0 0.0
    %991 = vmatpush1.msra.mxu0 0.0
    %992 = vmatprep.subr.mxu0 0.0
    %993 = vmatpush1.msra.mxu0 0.0
    %994 = vmatprep.subr.mxu0 0.0
    %995 = vmatpush1.msra.mxu0 0.0
    %996 = vmatprep.subr.mxu0 0.0
    %997 = vmatpush1.msra.mxu0 0.0
    %998 = vmatprep.subr.mxu0 0.0
    %999 = vmatpush1.msra.mxu0 0.0
    %1000 = vmatprep.subr.mxu0 0.0
    %1001 = vmatpush1.msra.mxu0 0.0
    %1002 = vmatprep.subr.mxu0 0.0
    %1003 = vmatpush1.msra.mxu0 0.0
    %1004 = vmatprep.subr.mxu0 0.0
    %1005 = vmatpush1.msra.mxu0 0.0
    %1006 = vmatprep.subr.mxu0 0.0
    %1007 = vmatpush1.msra.mxu0 0.0
    %1008 = vmatprep.subr.mxu0 0.0
    %1009 = vmatpush1.msra.mxu0 0.0
    %1010 = vmatprep.subr.mxu0 0.0
    %1011 = vmatpush1.msra.mxu0 0.0
    %1012 = vmatprep.subr.mxu0 0.0
    %1013 = vmatpush1.msra.mxu0 0.0
    %1014 = vmatprep.subr.mxu0 0.0
    %1015 = vmatpush1.msra.mxu0 %v978
    %1016 = vmatprep.subr.mxu0 0.0
    %1017 = vmatpush2.msra.mxu0 0.0
    %1018 = vmatprep.subr.mxu0 0.0
    %1019 = vmatpush2.msra.mxu0 0.0
    %1020 = vmatprep.subr.mxu0 0.0
    %1021 = vmatpush2.msra.mxu0 0.0
    %1022 = vmatprep.subr.mxu0 0.0
    %1023 = vmatpush2.msra.mxu0 0.0
    %1024 = vmatprep.subr.mxu0 0.0
    %1025 = vmatpush2.msra.mxu0 0.0
    %1026 = vmatprep.subr.mxu0 0.0
    %1027 = vmatpush2.msra.mxu0 0.0
    %1028 = vmatprep.subr.mxu0 0.0
    %1029 = vmatpush2.msra.mxu0 0.0
    %1030 = vmatprep.subr.mxu0 0.0
    %1031 = vmatpush2.msra.mxu0 0.0
    %1032 = vmatprep.subr.mxu0 0.0
    %1033 = vmatpush2.msra.mxu0 0.0
    %1034 = vmatprep.subr.mxu0 0.0
    %1035 = vmatpush2.msra.mxu0 0.0
    %1036 = vmatprep.subr.mxu0 0.0
    %1037 = vmatpush2.msra.mxu0 0.0
    %1038 = vmatprep.subr.mxu0 0.0
    %1039 = vmatpush2.msra.mxu0 0.0
    %1040 = vmatprep.subr.mxu0 0.0
    %1041 = vmatpush2.msra.mxu0 0.0
    %1042 = vmatprep.subr.mxu0 0.0
    %1043 = vmatpush2.msra.mxu0 0.0
    %1044 = vmatprep.subr.mxu0 0.0
    %1045 = vmatpush2.msra.mxu0 0.0
    %1046 = vmatprep.subr.mxu0 0.0
    %1047 = vmatpush2.msra.mxu0 0.0
    %1048 = vmatprep.mubr.f32.mxu0 0.0
    %1049 = vmatmul.mubr.f32.gmra.mxu0 %v982
    %v1050 = vpop.f32.mrf.mxu0
    %v1051 = vadd.f32 0.0, %v1050
    %v1052 = vpop.f32.mrf.mxu0
    %1053 = vdwg.mxu0
    %v1054 = vrot.slane %v672, 2
    %v1055 = vrot.slane %v674, 2
    %v1056 = vsel %vm409, %v1054, %v1055
    %v1057 = vsel %vm683, %v1056, 0
    %1059 = vmatprep.subr.mxu0 0.0
    %1060 = vmatpush1.msra.mxu0 0.0
    %1061 = vmatprep.subr.mxu0 0.0
    %1062 = vmatpush1.msra.mxu0 0.0
    %1063 = vmatprep.subr.mxu0 0.0
    %1064 = vmatpush1.msra.mxu0 0.0
    %1065 = vmatprep.subr.mxu0 0.0
    %1066 = vmatpush1.msra.mxu0 0.0
    %1067 = vmatprep.subr.mxu0 0.0
    %1068 = vmatpush1.msra.mxu0 0.0
    %1069 = vmatprep.subr.mxu0 0.0
    %1070 = vmatpush1.msra.mxu0 0.0
    %1071 = vmatprep.subr.mxu0 0.0
    %1072 = vmatpush1.msra.mxu0 0.0
    %1073 = vmatprep.subr.mxu0 0.0
    %1074 = vmatpush1.msra.mxu0 0.0
    %1075 = vmatprep.subr.mxu0 0.0
    %1076 = vmatpush1.msra.mxu0 0.0
    %1077 = vmatprep.subr.mxu0 0.0
    %1078 = vmatpush1.msra.mxu0 0.0
    %1079 = vmatprep.subr.mxu0 0.0
    %1080 = vmatpush1.msra.mxu0 0.0
    %1081 = vmatprep.subr.mxu0 0.0
    %1082 = vmatpush1.msra.mxu0 0.0
    %1083 = vmatprep.subr.mxu0 0.0
    %1084 = vmatpush1.msra.mxu0 0.0
    %1085 = vmatprep.subr.mxu0 0.0
    %1086 = vmatpush1.msra.mxu0 0.0
    %1087 = vmatprep.subr.mxu0 0.0
    %1088 = vmatpush1.msra.mxu0 0.0
    %1089 = vmatprep.subr.mxu0 0.0
    %1090 = vmatpush1.msra.mxu0 %v978
    %1091 = vmatprep.subr.mxu0 0.0
    %1092 = vmatpush2.msra.mxu0 0.0
    %1093 = vmatprep.subr.mxu0 0.0
    %1094 = vmatpush2.msra.mxu0 0.0
    %1095 = vmatprep.subr.mxu0 0.0
    %1096 = vmatpush2.msra.mxu0 0.0
    %1097 = vmatprep.subr.mxu0 0.0
    %1098 = vmatpush2.msra.mxu0 0.0
    %1099 = vmatprep.subr.mxu0 0.0
    %1100 = vmatpush2.msra.mxu0 0.0
    %1101 = vmatprep.subr.mxu0 0.0
    %1102 = vmatpush2.msra.mxu0 0.0
    %1103 = vmatprep.subr.mxu0 0.0
    %1104 = vmatpush2.msra.mxu0 0.0
    %1105 = vmatprep.subr.mxu0 0.0
    %1106 = vmatpush2.msra.mxu0 0.0
    %1107 = vmatprep.subr.mxu0 0.0
    %1108 = vmatpush2.msra.mxu0 0.0
    %1109 = vmatprep.subr.mxu0 0.0
    %1110 = vmatpush2.msra.mxu0 0.0
    %1111 = vmatprep.subr.mxu0 0.0
    %1112 = vmatpush2.msra.mxu0 0.0
    %1113 = vmatprep.subr.mxu0 0.0
    %1114 = vmatpush2.msra.mxu0 0.0
    %1115 = vmatprep.subr.mxu0 0.0
    %1116 = vmatpush2.msra.mxu0 0.0
    %1117 = vmatprep.subr.mxu0 0.0
    %1118 = vmatpush2.msra.mxu0 0.0
    %1119 = vmatprep.subr.mxu0 0.0
    %1120 = vmatpush2.msra.mxu0 0.0
    %1121 = vmatprep.subr.mxu0 0.0
    %1122 = vmatpush2.msra.mxu0 0.0
    %1123 = vmatprep.mubr.f32.mxu0 0.0
    %1124 = vmatmul.mubr.f32.gmra.mxu0 %v1057
    %v1125 = vpop.f32.mrf.mxu0
    %v1126 = vadd.f32 0.0, %v1125
    %v1127 = vpop.f32.mrf.mxu0
    %1128 = vdwg.mxu0
    %v1129 = vadd.f32 %v902, %v1051
    %v1130 = vadd.f32 %v974, %v1126
    %s1131 = scalar_lea.vmem %s3, 24
    %v1132 = vld [vmem:[%s1131] sm:$0xff]
    %v1133 = vrot.slane %v671, 3
    %v1134 = vrot.slane %v673, 3
    %v1135 = vsel %vm658, %v1133, %v1134
    %v1136 = vsel %vm683, %v1135, 0
    %1138 = vmatprep.subr.mxu0 0.0
    %1139 = vmatpush1.msra.mxu0 0.0
    %1140 = vmatprep.subr.mxu0 0.0
    %1141 = vmatpush1.msra.mxu0 0.0
    %1142 = vmatprep.subr.mxu0 0.0
    %1143 = vmatpush1.msra.mxu0 0.0
    %1144 = vmatprep.subr.mxu0 0.0
    %1145 = vmatpush1.msra.mxu0 0.0
    %1146 = vmatprep.subr.mxu0 0.0
    %1147 = vmatpush1.msra.mxu0 0.0
    %1148 = vmatprep.subr.mxu0 0.0
    %1149 = vmatpush1.msra.mxu0 0.0
    %1150 = vmatprep.subr.mxu0 0.0
    %1151 = vmatpush1.msra.mxu0 0.0
    %1152 = vmatprep.subr.mxu0 0.0
    %1153 = vmatpush1.msra.mxu0 0.0
    %1154 = vmatprep.subr.mxu0 0.0
    %1155 = vmatpush1.msra.mxu0 0.0
    %1156 = vmatprep.subr.mxu0 0.0
    %1157 = vmatpush1.msra.mxu0 0.0
    %1158 = vmatprep.subr.mxu0 0.0
    %1159 = vmatpush1.msra.mxu0 0.0
    %1160 = vmatprep.subr.mxu0 0.0
    %1161 = vmatpush1.msra.mxu0 0.0
    %1162 = vmatprep.subr.mxu0 0.0
    %1163 = vmatpush1.msra.mxu0 0.0
    %1164 = vmatprep.subr.mxu0 0.0
    %1165 = vmatpush1.msra.mxu0 0.0
    %1166 = vmatprep.subr.mxu0 0.0
    %1167 = vmatpush1.msra.mxu0 0.0
    %1168 = vmatprep.subr.mxu0 0.0
    %1169 = vmatpush1.msra.mxu0 %v1132
    %1170 = vmatprep.subr.mxu0 0.0
    %1171 = vmatpush2.msra.mxu0 0.0
    %1172 = vmatprep.subr.mxu0 0.0
    %1173 = vmatpush2.msra.mxu0 0.0
    %1174 = vmatprep.subr.mxu0 0.0
    %1175 = vmatpush2.msra.mxu0 0.0
    %1176 = vmatprep.subr.mxu0 0.0
    %1177 = vmatpush2.msra.mxu0 0.0
    %1178 = vmatprep.subr.mxu0 0.0
    %1179 = vmatpush2.msra.mxu0 0.0
    %1180 = vmatprep.subr.mxu0 0.0
    %1181 = vmatpush2.msra.mxu0 0.0
    %1182 = vmatprep.subr.mxu0 0.0
    %1183 = vmatpush2.msra.mxu0 0.0
    %1184 = vmatprep.subr.mxu0 0.0
    %1185 = vmatpush2.msra.mxu0 0.0
    %1186 = vmatprep.subr.mxu0 0.0
    %1187 = vmatpush2.msra.mxu0 0.0
    %1188 = vmatprep.subr.mxu0 0.0
    %1189 = vmatpush2.msra.mxu0 0.0
    %1190 = vmatprep.subr.mxu0 0.0
    %1191 = vmatpush2.msra.mxu0 0.0
    %1192 = vmatprep.subr.mxu0 0.0
    %1193 = vmatpush2.msra.mxu0 0.0
    %1194 = vmatprep.subr.mxu0 0.0
    %1195 = vmatpush2.msra.mxu0 0.0
    %1196 = vmatprep.subr.mxu0 0.0
    %1197 = vmatpush2.msra.mxu0 0.0
    %1198 = vmatprep.subr.mxu0 0.0
    %1199 = vmatpush2.msra.mxu0 0.0
    %1200 = vmatprep.subr.mxu0 0.0
    %1201 = vmatpush2.msra.mxu0 0.0
    %1202 = vmatprep.mubr.f32.mxu0 0.0
    %1203 = vmatmul.mubr.f32.gmra.mxu0 %v1136
    %v1204 = vpop.f32.mrf.mxu0
    %v1205 = vadd.f32 0.0, %v1204
    %v1206 = vpop.f32.mrf.mxu0
    %1207 = vdwg.mxu0
    %v1208 = vrot.slane %v672, 3
    %v1209 = vrot.slane %v674, 3
    %v1210 = vsel %vm658, %v1208, %v1209
    %v1211 = vsel %vm683, %v1210, 0
    %1213 = vmatprep.subr.mxu0 0.0
    %1214 = vmatpush1.msra.mxu0 0.0
    %1215 = vmatprep.subr.mxu0 0.0
    %1216 = vmatpush1.msra.mxu0 0.0
    %1217 = vmatprep.subr.mxu0 0.0
    %1218 = vmatpush1.msra.mxu0 0.0
    %1219 = vmatprep.subr.mxu0 0.0
    %1220 = vmatpush1.msra.mxu0 0.0
    %1221 = vmatprep.subr.mxu0 0.0
    %1222 = vmatpush1.msra.mxu0 0.0
    %1223 = vmatprep.subr.mxu0 0.0
    %1224 = vmatpush1.msra.mxu0 0.0
    %1225 = vmatprep.subr.mxu0 0.0
    %1226 = vmatpush1.msra.mxu0 0.0
    %1227 = vmatprep.subr.mxu0 0.0
    %1228 = vmatpush1.msra.mxu0 0.0
    %1229 = vmatprep.subr.mxu0 0.0
    %1230 = vmatpush1.msra.mxu0 0.0
    %1231 = vmatprep.subr.mxu0 0.0
    %1232 = vmatpush1.msra.mxu0 0.0
    %1233 = vmatprep.subr.mxu0 0.0
    %1234 = vmatpush1.msra.mxu0 0.0
    %1235 = vmatprep.subr.mxu0 0.0
    %1236 = vmatpush1.msra.mxu0 0.0
    %1237 = vmatprep.subr.mxu0 0.0
    %1238 = vmatpush1.msra.mxu0 0.0
    %1239 = vmatprep.subr.mxu0 0.0
    %1240 = vmatpush1.msra.mxu0 0.0
    %1241 = vmatprep.subr.mxu0 0.0
    %1242 = vmatpush1.msra.mxu0 0.0
    %1243 = vmatprep.subr.mxu0 0.0
    %1244 = vmatpush1.msra.mxu0 %v1132
    %1245 = vmatprep.subr.mxu0 0.0
    %1246 = vmatpush2.msra.mxu0 0.0
    %1247 = vmatprep.subr.mxu0 0.0
    %1248 = vmatpush2.msra.mxu0 0.0
    %1249 = vmatprep.subr.mxu0 0.0
    %1250 = vmatpush2.msra.mxu0 0.0
    %1251 = vmatprep.subr.mxu0 0.0
    %1252 = vmatpush2.msra.mxu0 0.0
    %1253 = vmatprep.subr.mxu0 0.0
    %1254 = vmatpush2.msra.mxu0 0.0
    %1255 = vmatprep.subr.mxu0 0.0
    %1256 = vmatpush2.msra.mxu0 0.0
    %1257 = vmatprep.subr.mxu0 0.0
    %1258 = vmatpush2.msra.mxu0 0.0
    %1259 = vmatprep.subr.mxu0 0.0
    %1260 = vmatpush2.msra.mxu0 0.0
    %1261 = vmatprep.subr.mxu0 0.0
    %1262 = vmatpush2.msra.mxu0 0.0
    %1263 = vmatprep.subr.mxu0 0.0
    %1264 = vmatpush2.msra.mxu0 0.0
    %1265 = vmatprep.subr.mxu0 0.0
    %1266 = vmatpush2.msra.mxu0 0.0
    %1267 = vmatprep.subr.mxu0 0.0
    %1268 = vmatpush2.msra.mxu0 0.0
    %1269 = vmatprep.subr.mxu0 0.0
    %1270 = vmatpush2.msra.mxu0 0.0
    %1271 = vmatprep.subr.mxu0 0.0
    %1272 = vmatpush2.msra.mxu0 0.0
    %1273 = vmatprep.subr.mxu0 0.0
    %1274 = vmatpush2.msra.mxu0 0.0
    %1275 = vmatprep.subr.mxu0 0.0
    %1276 = vmatpush2.msra.mxu0 0.0
    %1277 = vmatprep.mubr.f32.mxu0 0.0
    %1278 = vmatmul.mubr.f32.gmra.mxu0 %v1211
    %v1279 = vpop.f32.mrf.mxu0
    %v1280 = vadd.f32 0.0, %v1279
    %v1281 = vpop.f32.mrf.mxu0
    %1282 = vdwg.mxu0
    %v1283 = vadd.f32 %v1129, %v1205
    %v1284 = vadd.f32 %v1130, %v1280
    %v1285 = vld [vmem:[%s4] sm:$0x1]
    %v1287 = vlaneseq
    %v1288 = vshrl.u32 %v1287, 7
    %v1289 = vsub.s32 0, %v1288
    %v1290 = vrot.slane %v1285, %v1289
    %v1292 = vadd.f32 %v1283, %v1290
    %v1293 = vadd.f32 %v1284, %v1290
    %v1294 = vmax.f32 %v1292, 0.0
    %v1295 = vmax.f32 %v1293, 0.0
    %v1298 = vrot.slane %v1294, 1
    %v1299 = vrot.slane %v1295, 1
    %v1302 = vmax.f32 %v1294, %v1298
    %v1303 = vmax.f32 %v1295, %v1299
    %v1306 = vrot.slane %v1302, 1
    %v1307 = vrot.slane %v1303, 1
    %v1310 = vrot.slane %v1302, 2
    %v1311 = vrot.slane %v1303, 2
    %v1314 = vrot.slane %v1302, 3
    %v1315 = vrot.slane %v1303, 3
    %v1318 = vsel %vm50, %v1302, %v1306
    %v1319 = vsel %vm50, %v1303, %v1307
    %v1320 = vsel %vm650, %v1318, %v1310
    %v1321 = vsel %vm650, %v1319, %v1311
    %v1322 = vsel %vm653, %v1320, %v1314
    %v1323 = vsel %vm653, %v1321, %v1315
    %v1324 = vld [vmem:[%s5] sm:$0xff]
    %v1325 = vld [vmem:[%s6] sm:$0x1]
    %v1327 = vlaneseq
    %v1328 = vshrl.u32 %v1327, 7
    %v1329 = vsub.s32 0, %v1328
    %v1330 = vrot.slane %v1325, %v1329
    %v1333 = vsel %vm683, %v1322, 0
    %1335 = vmatprep.subr.mxu0 0.0
    %1336 = vmatpush1.msra.mxu0 0.0
    %1337 = vmatprep.subr.mxu0 0.0
    %1338 = vmatpush1.msra.mxu0 0.0
    %1339 = vmatprep.subr.mxu0 0.0
    %1340 = vmatpush1.msra.mxu0 0.0
    %1341 = vmatprep.subr.mxu0 0.0
    %1342 = vmatpush1.msra.mxu0 0.0
    %1343 = vmatprep.subr.mxu0 0.0
    %1344 = vmatpush1.msra.mxu0 0.0
    %1345 = vmatprep.subr.mxu0 0.0
    %1346 = vmatpush1.msra.mxu0 0.0
    %1347 = vmatprep.subr.mxu0 0.0
    %1348 = vmatpush1.msra.mxu0 0.0
    %1349 = vmatprep.subr.mxu0 0.0
    %1350 = vmatpush1.msra.mxu0 0.0
    %1351 = vmatprep.subr.mxu0 0.0
    %1352 = vmatpush1.msra.mxu0 0.0
    %1353 = vmatprep.subr.mxu0 0.0
    %1354 = vmatpush1.msra.mxu0 0.0
    %1355 = vmatprep.subr.mxu0 0.0
    %1356 = vmatpush1.msra.mxu0 0.0
    %1357 = vmatprep.subr.mxu0 0.0
    %1358 = vmatpush1.msra.mxu0 0.0
    %1359 = vmatprep.subr.mxu0 0.0
    %1360 = vmatpush1.msra.mxu0 0.0
    %1361 = vmatprep.subr.mxu0 0.0
    %1362 = vmatpush1.msra.mxu0 0.0
    %1363 = vmatprep.subr.mxu0 0.0
    %1364 = vmatpush1.msra.mxu0 0.0
    %1365 = vmatprep.subr.mxu0 0.0
    %1366 = vmatpush1.msra.mxu0 %v1324
    %1367 = vmatprep.subr.mxu0 0.0
    %1368 = vmatpush2.msra.mxu0 0.0
    %1369 = vmatprep.subr.mxu0 0.0
    %1370 = vmatpush2.msra.mxu0 0.0
    %1371 = vmatprep.subr.mxu0 0.0
    %1372 = vmatpush2.msra.mxu0 0.0
    %1373 = vmatprep.subr.mxu0 0.0
    %1374 = vmatpush2.msra.mxu0 0.0
    %1375 = vmatprep.subr.mxu0 0.0
    %1376 = vmatpush2.msra.mxu0 0.0
    %1377 = vmatprep.subr.mxu0 0.0
    %1378 = vmatpush2.msra.mxu0 0.0
    %1379 = vmatprep.subr.mxu0 0.0
    %1380 = vmatpush2.msra.mxu0 0.0
    %1381 = vmatprep.subr.mxu0 0.0
    %1382 = vmatpush2.msra.mxu0 0.0
    %1383 = vmatprep.subr.mxu0 0.0
    %1384 = vmatpush2.msra.mxu0 0.0
    %1385 = vmatprep.subr.mxu0 0.0
    %1386 = vmatpush2.msra.mxu0 0.0
    %1387 = vmatprep.subr.mxu0 0.0
    %1388 = vmatpush2.msra.mxu0 0.0
    %1389 = vmatprep.subr.mxu0 0.0
    %1390 = vmatpush2.msra.mxu0 0.0
    %1391 = vmatprep.subr.mxu0 0.0
    %1392 = vmatpush2.msra.mxu0 0.0
    %1393 = vmatprep.subr.mxu0 0.0
    %1394 = vmatpush2.msra.mxu0 0.0
    %1395 = vmatprep.subr.mxu0 0.0
    %1396 = vmatpush2.msra.mxu0 0.0
    %1397 = vmatprep.subr.mxu0 0.0
    %1398 = vmatpush2.msra.mxu0 0.0
    %1399 = vmatprep.mubr.f32.mxu0 0.0
    %1400 = vmatmul.mubr.f32.gmra.mxu0 %v1333
    %v1401 = vpop.f32.mrf.mxu0
    %v1402 = vadd.f32 %v1330, %v1401
    %v1403 = vpop.f32.mrf.mxu0
    %1404 = vdwg.mxu0
    %v1406 = vsel %vm683, %v1323, 0
    %1408 = vmatprep.subr.mxu0 0.0
    %1409 = vmatpush1.msra.mxu0 0.0
    %1410 = vmatprep.subr.mxu0 0.0
    %1411 = vmatpush1.msra.mxu0 0.0
    %1412 = vmatprep.subr.mxu0 0.0
    %1413 = vmatpush1.msra.mxu0 0.0
    %1414 = vmatprep.subr.mxu0 0.0
    %1415 = vmatpush1.msra.mxu0 0.0
    %1416 = vmatprep.subr.mxu0 0.0
    %1417 = vmatpush1.msra.mxu0 0.0
    %1418 = vmatprep.subr.mxu0 0.0
    %1419 = vmatpush1.msra.mxu0 0.0
    %1420 = vmatprep.subr.mxu0 0.0
    %1421 = vmatpush1.msra.mxu0 0.0
    %1422 = vmatprep.subr.mxu0 0.0
    %1423 = vmatpush1.msra.mxu0 0.0
    %1424 = vmatprep.subr.mxu0 0.0
    %1425 = vmatpush1.msra.mxu0 0.0
    %1426 = vmatprep.subr.mxu0 0.0
    %1427 = vmatpush1.msra.mxu0 0.0
    %1428 = vmatprep.subr.mxu0 0.0
    %1429 = vmatpush1.msra.mxu0 0.0
    %1430 = vmatprep.subr.mxu0 0.0
    %1431 = vmatpush1.msra.mxu0 0.0
    %1432 = vmatprep.subr.mxu0 0.0
    %1433 = vmatpush1.msra.mxu0 0.0
    %1434 = vmatprep.subr.mxu0 0.0
    %1435 = vmatpush1.msra.mxu0 0.0
    %1436 = vmatprep.subr.mxu0 0.0
    %1437 = vmatpush1.msra.mxu0 0.0
    %1438 = vmatprep.subr.mxu0 0.0
    %1439 = vmatpush1.msra.mxu0 %v1324
    %1440 = vmatprep.subr.mxu0 0.0
    %1441 = vmatpush2.msra.mxu0 0.0
    %1442 = vmatprep.subr.mxu0 0.0
    %1443 = vmatpush2.msra.mxu0 0.0
    %1444 = vmatprep.subr.mxu0 0.0
    %1445 = vmatpush2.msra.mxu0 0.0
    %1446 = vmatprep.subr.mxu0 0.0
    %1447 = vmatpush2.msra.mxu0 0.0
    %1448 = vmatprep.subr.mxu0 0.0
    %1449 = vmatpush2.msra.mxu0 0.0
    %1450 = vmatprep.subr.mxu0 0.0
    %1451 = vmatpush2.msra.mxu0 0.0
    %1452 = vmatprep.subr.mxu0 0.0
    %1453 = vmatpush2.msra.mxu0 0.0
    %1454 = vmatprep.subr.mxu0 0.0
    %1455 = vmatpush2.msra.mxu0 0.0
    %1456 = vmatprep.subr.mxu0 0.0
    %1457 = vmatpush2.msra.mxu0 0.0
    %1458 = vmatprep.subr.mxu0 0.0
    %1459 = vmatpush2.msra.mxu0 0.0
    %1460 = vmatprep.subr.mxu0 0.0
    %1461 = vmatpush2.msra.mxu0 0.0
    %1462 = vmatprep.subr.mxu0 0.0
    %1463 = vmatpush2.msra.mxu0 0.0
    %1464 = vmatprep.subr.mxu0 0.0
    %1465 = vmatpush2.msra.mxu0 0.0
    %1466 = vmatprep.subr.mxu0 0.0
    %1467 = vmatpush2.msra.mxu0 0.0
    %1468 = vmatprep.subr.mxu0 0.0
    %1469 = vmatpush2.msra.mxu0 0.0
    %1470 = vmatprep.subr.mxu0 0.0
    %1471 = vmatpush2.msra.mxu0 0.0
    %1472 = vmatprep.mubr.f32.mxu0 0.0
    %1473 = vmatmul.mubr.f32.gmra.mxu0 %v1406
    %v1474 = vpop.f32.mrf.mxu0
    %v1475 = vadd.f32 %v1330, %v1474
    %v1476 = vpop.f32.mrf.mxu0
    %1477 = vdwg.mxu0
    %v1478 = vmax.f32 %v1402, 0.0
    %v1479 = vmax.f32 %v1475, 0.0
    %v1480 = vld [vmem:[%s7] sm:$0xff]
    %v1481 = vld [vmem:[%s7 + $0x8] sm:$0xff]
    %v1482 = vld [vmem:[%s8] sm:$0x1]
    %v1484 = vlaneseq
    %v1485 = vshrl.u32 %v1484, 7
    %v1486 = vsub.s32 0, %v1485
    %v1487 = vrot.slane %v1482, %v1486
    %vm1489 = vcmask 130048
    %v1491 = vsel %vm1489, %v1478, 0
    %1493 = vmatprep.subr.mxu0 0.0
    %1494 = vmatpush1.msra.mxu0 0.0
    %1495 = vmatprep.subr.mxu0 0.0
    %1496 = vmatpush1.msra.mxu0 0.0
    %1497 = vmatprep.subr.mxu0 0.0
    %1498 = vmatpush1.msra.mxu0 0.0
    %1499 = vmatprep.subr.mxu0 0.0
    %1500 = vmatpush1.msra.mxu0 0.0
    %1501 = vmatprep.subr.mxu0 0.0
    %1502 = vmatpush1.msra.mxu0 0.0
    %1503 = vmatprep.subr.mxu0 0.0
    %1504 = vmatpush1.msra.mxu0 0.0
    %1505 = vmatprep.subr.mxu0 0.0
    %1506 = vmatpush1.msra.mxu0 0.0
    %1507 = vmatprep.subr.mxu0 0.0
    %1508 = vmatpush1.msra.mxu0 0.0
    %1509 = vmatprep.subr.mxu0 0.0
    %1510 = vmatpush1.msra.mxu0 0.0
    %1511 = vmatprep.subr.mxu0 0.0
    %1512 = vmatpush1.msra.mxu0 0.0
    %1513 = vmatprep.subr.mxu0 0.0
    %1514 = vmatpush1.msra.mxu0 0.0
    %1515 = vmatprep.subr.mxu0 0.0
    %1516 = vmatpush1.msra.mxu0 0.0
    %1517 = vmatprep.subr.mxu0 0.0
    %1518 = vmatpush1.msra.mxu0 0.0
    %1519 = vmatprep.subr.mxu0 0.0
    %1520 = vmatpush1.msra.mxu0 0.0
    %1521 = vmatprep.subr.mxu0 0.0
    %1522 = vmatpush1.msra.mxu0 %v1481
    %1523 = vmatprep.subr.mxu0 0.0
    %1524 = vmatpush1.msra.mxu0 %v1480
    %1525 = vmatprep.subr.mxu0 0.0
    %1526 = vmatpush2.msra.mxu0 0.0
    %1527 = vmatprep.subr.mxu0 0.0
    %1528 = vmatpush2.msra.mxu0 0.0
    %1529 = vmatprep.subr.mxu0 0.0
    %1530 = vmatpush2.msra.mxu0 0.0
    %1531 = vmatprep.subr.mxu0 0.0
    %1532 = vmatpush2.msra.mxu0 0.0
    %1533 = vmatprep.subr.mxu0 0.0
    %1534 = vmatpush2.msra.mxu0 0.0
    %1535 = vmatprep.subr.mxu0 0.0
    %1536 = vmatpush2.msra.mxu0 0.0
    %1537 = vmatprep.subr.mxu0 0.0
    %1538 = vmatpush2.msra.mxu0 0.0
    %1539 = vmatprep.subr.mxu0 0.0
    %1540 = vmatpush2.msra.mxu0 0.0
    %1541 = vmatprep.subr.mxu0 0.0
    %1542 = vmatpush2.msra.mxu0 0.0
    %1543 = vmatprep.subr.mxu0 0.0
    %1544 = vmatpush2.msra.mxu0 0.0
    %1545 = vmatprep.subr.mxu0 0.0
    %1546 = vmatpush2.msra.mxu0 0.0
    %1547 = vmatprep.subr.mxu0 0.0
    %1548 = vmatpush2.msra.mxu0 0.0
    %1549 = vmatprep.subr.mxu0 0.0
    %1550 = vmatpush2.msra.mxu0 0.0
    %1551 = vmatprep.subr.mxu0 0.0
    %1552 = vmatpush2.msra.mxu0 0.0
    %1553 = vmatprep.subr.mxu0 0.0
    %1554 = vmatpush2.msra.mxu0 0.0
    %1555 = vmatprep.subr.mxu0 0.0
    %1556 = vmatpush2.msra.mxu0 0.0
    %1557 = vmatprep.mubr.f32.mxu0 0.0
    %1558 = vmatmul.mubr.f32.gmra.mxu0 %v1491
    %v1559 = vpop.f32.mrf.mxu0
    %v1560 = vadd.f32 %v1487, %v1559
    %v1561 = vpop.f32.mrf.mxu0
    %1562 = vdwg.mxu0
    %v1564 = vsel %vm1489, %v1479, 0
    %1566 = vmatprep.subr.mxu0 0.0
    %1567 = vmatpush1.msra.mxu0 0.0
    %1568 = vmatprep.subr.mxu0 0.0
    %1569 = vmatpush1.msra.mxu0 0.0
    %1570 = vmatprep.subr.mxu0 0.0
    %1571 = vmatpush1.msra.mxu0 0.0
    %1572 = vmatprep.subr.mxu0 0.0
    %1573 = vmatpush1.msra.mxu0 0.0
    %1574 = vmatprep.subr.mxu0 0.0
    %1575 = vmatpush1.msra.mxu0 0.0
    %1576 = vmatprep.subr.mxu0 0.0
    %1577 = vmatpush1.msra.mxu0 0.0
    %1578 = vmatprep.subr.mxu0 0.0
    %1579 = vmatpush1.msra.mxu0 0.0
    %1580 = vmatprep.subr.mxu0 0.0
    %1581 = vmatpush1.msra.mxu0 0.0
    %1582 = vmatprep.subr.mxu0 0.0
    %1583 = vmatpush1.msra.mxu0 0.0
    %1584 = vmatprep.subr.mxu0 0.0
    %1585 = vmatpush1.msra.mxu0 0.0
    %1586 = vmatprep.subr.mxu0 0.0
    %1587 = vmatpush1.msra.mxu0 0.0
    %1588 = vmatprep.subr.mxu0 0.0
    %1589 = vmatpush1.msra.mxu0 0.0
    %1590 = vmatprep.subr.mxu0 0.0
    %1591 = vmatpush1.msra.mxu0 0.0
    %1592 = vmatprep.subr.mxu0 0.0
    %1593 = vmatpush1.msra.mxu0 0.0
    %1594 = vmatprep.subr.mxu0 0.0
    %1595 = vmatpush1.msra.mxu0 %v1481
    %1596 = vmatprep.subr.mxu0 0.0
    %1597 = vmatpush1.msra.mxu0 %v1480
    %1598 = vmatprep.subr.mxu0 0.0
    %1599 = vmatpush2.msra.mxu0 0.0
    %1600 = vmatprep.subr.mxu0 0.0
    %1601 = vmatpush2.msra.mxu0 0.0
    %1602 = vmatprep.subr.mxu0 0.0
    %1603 = vmatpush2.msra.mxu0 0.0
    %1604 = vmatprep.subr.mxu0 0.0
    %1605 = vmatpush2.msra.mxu0 0.0
    %1606 = vmatprep.subr.mxu0 0.0
    %1607 = vmatpush2.msra.mxu0 0.0
    %1608 = vmatprep.subr.mxu0 0.0
    %1609 = vmatpush2.msra.mxu0 0.0
    %1610 = vmatprep.subr.mxu0 0.0
    %1611 = vmatpush2.msra.mxu0 0.0
    %1612 = vmatprep.subr.mxu0 0.0
    %1613 = vmatpush2.msra.mxu0 0.0
    %1614 = vmatprep.subr.mxu0 0.0
    %1615 = vmatpush2.msra.mxu0 0.0
    %1616 = vmatprep.subr.mxu0 0.0
    %1617 = vmatpush2.msra.mxu0 0.0
    %1618 = vmatprep.subr.mxu0 0.0
    %1619 = vmatpush2.msra.mxu0 0.0
    %1620 = vmatprep.subr.mxu0 0.0
    %1621 = vmatpush2.msra.mxu0 0.0
    %1622 = vmatprep.subr.mxu0 0.0
    %1623 = vmatpush2.msra.mxu0 0.0
    %1624 = vmatprep.subr.mxu0 0.0
    %1625 = vmatpush2.msra.mxu0 0.0
    %1626 = vmatprep.subr.mxu0 0.0
    %1627 = vmatpush2.msra.mxu0 0.0
    %1628 = vmatprep.subr.mxu0 0.0
    %1629 = vmatpush2.msra.mxu0 0.0
    %1630 = vmatprep.mubr.f32.mxu0 0.0
    %1631 = vmatmul.mubr.f32.gmra.mxu0 %v1564
    %v1632 = vpop.f32.mrf.mxu0
    %v1633 = vadd.f32 %v1487, %v1632
    %v1634 = vpop.f32.mrf.mxu0
    %1635 = vdwg.mxu0
    %v1636 = vmax.f32 %v1560, 0.0
    %v1637 = vmax.f32 %v1633, 0.0
    %v1638 = vld [vmem:[%s9] sm:$0xff]
    %v1640 = vsel %vm683, %v1636, 0
    %1642 = vmatprep.subr.mxu0 0.0
    %1643 = vmatpush1.msra.mxu0 0.0
    %1644 = vmatprep.subr.mxu0 0.0
    %1645 = vmatpush1.msra.mxu0 0.0
    %1646 = vmatprep.subr.mxu0 0.0
    %1647 = vmatpush1.msra.mxu0 0.0
    %1648 = vmatprep.subr.mxu0 0.0
    %1649 = vmatpush1.msra.mxu0 0.0
    %1650 = vmatprep.subr.mxu0 0.0
    %1651 = vmatpush1.msra.mxu0 0.0
    %1652 = vmatprep.subr.mxu0 0.0
    %1653 = vmatpush1.msra.mxu0 0.0
    %1654 = vmatprep.subr.mxu0 0.0
    %1655 = vmatpush1.msra.mxu0 0.0
    %1656 = vmatprep.subr.mxu0 0.0
    %1657 = vmatpush1.msra.mxu0 0.0
    %1658 = vmatprep.subr.mxu0 0.0
    %1659 = vmatpush1.msra.mxu0 0.0
    %1660 = vmatprep.subr.mxu0 0.0
    %1661 = vmatpush1.msra.mxu0 0.0
    %1662 = vmatprep.subr.mxu0 0.0
    %1663 = vmatpush1.msra.mxu0 0.0
    %1664 = vmatprep.subr.mxu0 0.0
    %1665 = vmatpush1.msra.mxu0 0.0
    %1666 = vmatprep.subr.mxu0 0.0
    %1667 = vmatpush1.msra.mxu0 0.0
    %1668 = vmatprep.subr.mxu0 0.0
    %1669 = vmatpush1.msra.mxu0 0.0
    %1670 = vmatprep.subr.mxu0 0.0
    %1671 = vmatpush1.msra.mxu0 0.0
    %1672 = vmatprep.subr.mxu0 0.0
    %1673 = vmatpush1.msra.mxu0 %v1638
    %1674 = vmatprep.subr.mxu0 0.0
    %1675 = vmatpush2.msra.mxu0 0.0
    %1676 = vmatprep.subr.mxu0 0.0
    %1677 = vmatpush2.msra.mxu0 0.0
    %1678 = vmatprep.subr.mxu0 0.0
    %1679 = vmatpush2.msra.mxu0 0.0
    %1680 = vmatprep.subr.mxu0 0.0
    %1681 = vmatpush2.msra.mxu0 0.0
    %1682 = vmatprep.subr.mxu0 0.0
    %1683 = vmatpush2.msra.mxu0 0.0
    %1684 = vmatprep.subr.mxu0 0.0
    %1685 = vmatpush2.msra.mxu0 0.0
    %1686 = vmatprep.subr.mxu0 0.0
    %1687 = vmatpush2.msra.mxu0 0.0
    %1688 = vmatprep.subr.mxu0 0.0
    %1689 = vmatpush2.msra.mxu0 0.0
    %1690 = vmatprep.subr.mxu0 0.0
    %1691 = vmatpush2.msra.mxu0 0.0
    %1692 = vmatprep.subr.mxu0 0.0
    %1693 = vmatpush2.msra.mxu0 0.0
    %1694 = vmatprep.subr.mxu0 0.0
    %1695 = vmatpush2.msra.mxu0 0.0
    %1696 = vmatprep.subr.mxu0 0.0
    %1697 = vmatpush2.msra.mxu0 0.0
    %1698 = vmatprep.subr.mxu0 0.0
    %1699 = vmatpush2.msra.mxu0 0.0
    %1700 = vmatprep.subr.mxu0 0.0
    %1701 = vmatpush2.msra.mxu0 0.0
    %1702 = vmatprep.subr.mxu0 0.0
    %1703 = vmatpush2.msra.mxu0 0.0
    %1704 = vmatprep.subr.mxu0 0.0
    %1705 = vmatpush2.msra.mxu0 0.0
    %1706 = vmatprep.mubr.f32.mxu0 0.0
    %1707 = vmatmul.mubr.f32.gmra.mxu0 %v1640
    %v1708 = vpop.f32.mrf.mxu0
    %v1709 = vadd.f32 0.0, %v1708
    %v1710 = vpop.f32.mrf.mxu0
    %1711 = vdwg.mxu0
    %v1713 = vsel %vm683, %v1637, 0
    %1715 = vmatprep.subr.mxu0 0.0
    %1716 = vmatpush1.msra.mxu0 0.0
    %1717 = vmatprep.subr.mxu0 0.0
    %1718 = vmatpush1.msra.mxu0 0.0
    %1719 = vmatprep.subr.mxu0 0.0
    %1720 = vmatpush1.msra.mxu0 0.0
    %1721 = vmatprep.subr.mxu0 0.0
    %1722 = vmatpush1.msra.mxu0 0.0
    %1723 = vmatprep.subr.mxu0 0.0
    %1724 = vmatpush1.msra.mxu0 0.0
    %1725 = vmatprep.subr.mxu0 0.0
    %1726 = vmatpush1.msra.mxu0 0.0
    %1727 = vmatprep.subr.mxu0 0.0
    %1728 = vmatpush1.msra.mxu0 0.0
    %1729 = vmatprep.subr.mxu0 0.0
    %1730 = vmatpush1.msra.mxu0 0.0
    %1731 = vmatprep.subr.mxu0 0.0
    %1732 = vmatpush1.msra.mxu0 0.0
    %1733 = vmatprep.subr.mxu0 0.0
    %1734 = vmatpush1.msra.mxu0 0.0
    %1735 = vmatprep.subr.mxu0 0.0
    %1736 = vmatpush1.msra.mxu0 0.0
    %1737 = vmatprep.subr.mxu0 0.0
    %1738 = vmatpush1.msra.mxu0 0.0
    %1739 = vmatprep.subr.mxu0 0.0
    %1740 = vmatpush1.msra.mxu0 0.0
    %1741 = vmatprep.subr.mxu0 0.0
    %1742 = vmatpush1.msra.mxu0 0.0
    %1743 = vmatprep.subr.mxu0 0.0
    %1744 = vmatpush1.msra.mxu0 0.0
    %1745 = vmatprep.subr.mxu0 0.0
    %1746 = vmatpush1.msra.mxu0 %v1638
    %1747 = vmatprep.subr.mxu0 0.0
    %1748 = vmatpush2.msra.mxu0 0.0
    %1749 = vmatprep.subr.mxu0 0.0
    %1750 = vmatpush2.msra.mxu0 0.0
    %1751 = vmatprep.subr.mxu0 0.0
    %1752 = vmatpush2.msra.mxu0 0.0
    %1753 = vmatprep.subr.mxu0 0.0
    %1754 = vmatpush2.msra.mxu0 0.0
    %1755 = vmatprep.subr.mxu0 0.0
    %1756 = vmatpush2.msra.mxu0 0.0
    %1757 = vmatprep.subr.mxu0 0.0
    %1758 = vmatpush2.msra.mxu0 0.0
    %1759 = vmatprep.subr.mxu0 0.0
    %1760 = vmatpush2.msra.mxu0 0.0
    %1761 = vmatprep.subr.mxu0 0.0
    %1762 = vmatpush2.msra.mxu0 0.0
    %1763 = vmatprep.subr.mxu0 0.0
    %1764 = vmatpush2.msra.mxu0 0.0
    %1765 = vmatprep.subr.mxu0 0.0
    %1766 = vmatpush2.msra.mxu0 0.0
    %1767 = vmatprep.subr.mxu0 0.0
    %1768 = vmatpush2.msra.mxu0 0.0
    %1769 = vmatprep.subr.mxu0 0.0
    %1770 = vmatpush2.msra.mxu0 0.0
    %1771 = vmatprep.subr.mxu0 0.0
    %1772 = vmatpush2.msra.mxu0 0.0
    %1773 = vmatprep.subr.mxu0 0.0
    %1774 = vmatpush2.msra.mxu0 0.0
    %1775 = vmatprep.subr.mxu0 0.0
    %1776 = vmatpush2.msra.mxu0 0.0
    %1777 = vmatprep.subr.mxu0 0.0
    %1778 = vmatpush2.msra.mxu0 0.0
    %1779 = vmatprep.mubr.f32.mxu0 0.0
    %1780 = vmatmul.mubr.f32.gmra.mxu0 %v1713
    %v1781 = vpop.f32.mrf.mxu0
    %v1782 = vadd.f32 0.0, %v1781
    %v1783 = vpop.f32.mrf.mxu0
    %1784 = vdwg.mxu0
    %v1785 = vmul.f32 %v1636, %v1636
    %v1786 = vmul.f32 %v1637, %v1637
    %vm1787 = vcmask 60416
    %v1788 = vsel %vm1787, %v1785, 0.0
    %1789 = vadd.xlane.f32.xlu0 %v1788
    %v1790 = vpop.xlane.xlu0 %1789
    %v1791 = vsel %vm1787, %v1786, 0.0
    %1792 = vadd.xlane.f32.xlu0 %v1791
    %v1793 = vpop.xlane.xlu0 %1792
    %v1794 = vmul.f32 %v1638, %v1638
    %vm1795 = vcmask 48128
    %v1796 = vsel %vm1795, %v1794, 0.0
    %v1797 = vrot.slane %v1796, 4
    %v1798 = vadd.f32 %v1796, %v1797
    %v1799 = vrot.slane %v1798, 2
    %v1800 = vadd.f32 %v1798, %v1799
    %v1801 = vrot.slane %v1800, 1
    %v1802 = vadd.f32 %v1800, %v1801
    %v1803 = vadd.f32 %v1790, %v1802
    %v1804 = vadd.f32 %v1793, %v1802
    %v1805 = vmul.f32 %v1709, 2.0
    %v1806 = vmul.f32 %v1782, 2.0
    %v1807 = vsub.f32 %v1803, %v1805
    %v1808 = vsub.f32 %v1804, %v1806
    %v1809 = vmax.f32 %v1807, 0.0
    %v1810 = vmax.f32 %v1808, 0.0
    %v1811 = vrsqrt.pop %v1809
    %v1812 = vmul.f32 %v1809, %v1811
    %vm1813 = vcmp.eq.f32.partialorder %v1809, inf
    %v1814 = vsel %vm1813, %v1809, %v1812
    %vm1815 = vcmp.eq.f32.partialorder %v1809, 0.0
    %v1816 = vand.u32 %v1809, 2147483648
    %v1817 = vsel %vm1815, %v1816, %v1814
    %v1818 = vrsqrt.pop %v1810
    %v1819 = vmul.f32 %v1810, %v1818
    %vm1820 = vcmp.eq.f32.partialorder %v1810, inf
    %v1821 = vsel %vm1820, %v1810, %v1819
    %vm1822 = vcmp.eq.f32.partialorder %v1810, 0.0
    %v1823 = vand.u32 %v1810, 2147483648
    %v1824 = vsel %vm1822, %v1823, %v1821
    %v1827 = vrot.slane %v1817, 1
    %v1828 = vrot.slane %v1824, 1
    %v1831 = vmin.f32 %v1817, %v1827
    %v1832 = vmin.f32 %v1824, %v1828
    %v1833 = vrot.slane %v1817, 2
    %v1834 = vrot.slane %v1824, 2
    %v1837 = vmin.f32 %v1831, %v1833
    %v1838 = vmin.f32 %v1832, %v1834
    %v1839 = vrot.slane %v1817, 3
    %v1840 = vrot.slane %v1824, 3
    %v1843 = vmin.f32 %v1837, %v1839
    %v1844 = vmin.f32 %v1838, %v1840
    %v1845 = vadd.f32 %v1843, 1.0
    %v1846 = vadd.f32 %v1844, 1.0
    %v1847 = vlog2.pop %v1845
    %v1848 = vmul.f32 %v1847, 0.6931472
    %v1849 = vlog2.pop %v1846
    %v1850 = vmul.f32 %v1849, 0.6931472
    %v1851 = vadd.f32 %v1843, 0.0001
    %v1852 = vadd.f32 %v1844, 0.0001
    %v1853 = vlog2.pop %v1851
    %v1854 = vmul.f32 %v1853, 0.6931472
    %v1855 = vlog2.pop %v1852
    %v1856 = vmul.f32 %v1855, 0.6931472
    %v1857 = vsub.f32 %v1848, %v1854
    %v1858 = vsub.f32 %v1850, %v1856
    %v1859 = vld [vmem:[%s10] sm:$0x3f]
    %v1861 = vsel %vm1795, %v1857, 0
    %v1864 = vsel %vm409, %v1859, 0
    %1866 = vmatprep.subr.mxu0 0.0
    %1867 = vmatpush1.msra.mxu0 0.0
    %1868 = vmatprep.subr.mxu0 0.0
    %1869 = vmatpush1.msra.mxu0 0.0
    %1870 = vmatprep.subr.mxu0 0.0
    %1871 = vmatpush1.msra.mxu0 0.0
    %1872 = vmatprep.subr.mxu0 0.0
    %1873 = vmatpush1.msra.mxu0 0.0
    %1874 = vmatprep.subr.mxu0 0.0
    %1875 = vmatpush1.msra.mxu0 0.0
    %1876 = vmatprep.subr.mxu0 0.0
    %1877 = vmatpush1.msra.mxu0 0.0
    %1878 = vmatprep.subr.mxu0 0.0
    %1879 = vmatpush1.msra.mxu0 0.0
    %1880 = vmatprep.subr.mxu0 0.0
    %1881 = vmatpush1.msra.mxu0 0.0
    %1882 = vmatprep.subr.mxu0 0.0
    %1883 = vmatpush1.msra.mxu0 0.0
    %1884 = vmatprep.subr.mxu0 0.0
    %1885 = vmatpush1.msra.mxu0 0.0
    %1886 = vmatprep.subr.mxu0 0.0
    %1887 = vmatpush1.msra.mxu0 0.0
    %1888 = vmatprep.subr.mxu0 0.0
    %1889 = vmatpush1.msra.mxu0 0.0
    %1890 = vmatprep.subr.mxu0 0.0
    %1891 = vmatpush1.msra.mxu0 0.0
    %1892 = vmatprep.subr.mxu0 0.0
    %1893 = vmatpush1.msra.mxu0 0.0
    %1894 = vmatprep.subr.mxu0 0.0
    %1895 = vmatpush1.msra.mxu0 0.0
    %1896 = vmatprep.subr.mxu0 0.0
    %1897 = vmatpush1.msra.mxu0 %v1864
    %1898 = vmatprep.subr.mxu0 0.0
    %1899 = vmatpush2.msra.mxu0 0.0
    %1900 = vmatprep.subr.mxu0 0.0
    %1901 = vmatpush2.msra.mxu0 0.0
    %1902 = vmatprep.subr.mxu0 0.0
    %1903 = vmatpush2.msra.mxu0 0.0
    %1904 = vmatprep.subr.mxu0 0.0
    %1905 = vmatpush2.msra.mxu0 0.0
    %1906 = vmatprep.subr.mxu0 0.0
    %1907 = vmatpush2.msra.mxu0 0.0
    %1908 = vmatprep.subr.mxu0 0.0
    %1909 = vmatpush2.msra.mxu0 0.0
    %1910 = vmatprep.subr.mxu0 0.0
    %1911 = vmatpush2.msra.mxu0 0.0
    %1912 = vmatprep.subr.mxu0 0.0
    %1913 = vmatpush2.msra.mxu0 0.0
    %1914 = vmatprep.subr.mxu0 0.0
    %1915 = vmatpush2.msra.mxu0 0.0
    %1916 = vmatprep.subr.mxu0 0.0
    %1917 = vmatpush2.msra.mxu0 0.0
    %1918 = vmatprep.subr.mxu0 0.0
    %1919 = vmatpush2.msra.mxu0 0.0
    %1920 = vmatprep.subr.mxu0 0.0
    %1921 = vmatpush2.msra.mxu0 0.0
    %1922 = vmatprep.subr.mxu0 0.0
    %1923 = vmatpush2.msra.mxu0 0.0
    %1924 = vmatprep.subr.mxu0 0.0
    %1925 = vmatpush2.msra.mxu0 0.0
    %1926 = vmatprep.subr.mxu0 0.0
    %1927 = vmatpush2.msra.mxu0 0.0
    %1928 = vmatprep.subr.mxu0 0.0
    %1929 = vmatpush2.msra.mxu0 0.0
    %1930 = vmatprep.mubr.f32.mxu0 0.0
    %1931 = vmatmul.mubr.f32.gmra.mxu0 %v1861
    %v1932 = vpop.f32.mrf.mxu0
    %v1933 = vadd.f32 0.0, %v1932
    %v1934 = vpop.f32.mrf.mxu0
    %1935 = vdwg.mxu0
    %v1937 = vsel %vm1795, %v1858, 0
    %1939 = vmatprep.subr.mxu0 0.0
    %1940 = vmatpush1.msra.mxu0 0.0
    %1941 = vmatprep.subr.mxu0 0.0
    %1942 = vmatpush1.msra.mxu0 0.0
    %1943 = vmatprep.subr.mxu0 0.0
    %1944 = vmatpush1.msra.mxu0 0.0
    %1945 = vmatprep.subr.mxu0 0.0
    %1946 = vmatpush1.msra.mxu0 0.0
    %1947 = vmatprep.subr.mxu0 0.0
    %1948 = vmatpush1.msra.mxu0 0.0
    %1949 = vmatprep.subr.mxu0 0.0
    %1950 = vmatpush1.msra.mxu0 0.0
    %1951 = vmatprep.subr.mxu0 0.0
    %1952 = vmatpush1.msra.mxu0 0.0
    %1953 = vmatprep.subr.mxu0 0.0
    %1954 = vmatpush1.msra.mxu0 0.0
    %1955 = vmatprep.subr.mxu0 0.0
    %1956 = vmatpush1.msra.mxu0 0.0
    %1957 = vmatprep.subr.mxu0 0.0
    %1958 = vmatpush1.msra.mxu0 0.0
    %1959 = vmatprep.subr.mxu0 0.0
    %1960 = vmatpush1.msra.mxu0 0.0
    %1961 = vmatprep.subr.mxu0 0.0
    %1962 = vmatpush1.msra.mxu0 0.0
    %1963 = vmatprep.subr.mxu0 0.0
    %1964 = vmatpush1.msra.mxu0 0.0
    %1965 = vmatprep.subr.mxu0 0.0
    %1966 = vmatpush1.msra.mxu0 0.0
    %1967 = vmatprep.subr.mxu0 0.0
    %1968 = vmatpush1.msra.mxu0 0.0
    %1969 = vmatprep.subr.mxu0 0.0
    %1970 = vmatpush1.msra.mxu0 %v1864
    %1971 = vmatprep.subr.mxu0 0.0
    %1972 = vmatpush2.msra.mxu0 0.0
    %1973 = vmatprep.subr.mxu0 0.0
    %1974 = vmatpush2.msra.mxu0 0.0
    %1975 = vmatprep.subr.mxu0 0.0
    %1976 = vmatpush2.msra.mxu0 0.0
    %1977 = vmatprep.subr.mxu0 0.0
    %1978 = vmatpush2.msra.mxu0 0.0
    %1979 = vmatprep.subr.mxu0 0.0
    %1980 = vmatpush2.msra.mxu0 0.0
    %1981 = vmatprep.subr.mxu0 0.0
    %1982 = vmatpush2.msra.mxu0 0.0
    %1983 = vmatprep.subr.mxu0 0.0
    %1984 = vmatpush2.msra.mxu0 0.0
    %1985 = vmatprep.subr.mxu0 0.0
    %1986 = vmatpush2.msra.mxu0 0.0
    %1987 = vmatprep.subr.mxu0 0.0
    %1988 = vmatpush2.msra.mxu0 0.0
    %1989 = vmatprep.subr.mxu0 0.0
    %1990 = vmatpush2.msra.mxu0 0.0
    %1991 = vmatprep.subr.mxu0 0.0
    %1992 = vmatpush2.msra.mxu0 0.0
    %1993 = vmatprep.subr.mxu0 0.0
    %1994 = vmatpush2.msra.mxu0 0.0
    %1995 = vmatprep.subr.mxu0 0.0
    %1996 = vmatpush2.msra.mxu0 0.0
    %1997 = vmatprep.subr.mxu0 0.0
    %1998 = vmatpush2.msra.mxu0 0.0
    %1999 = vmatprep.subr.mxu0 0.0
    %2000 = vmatpush2.msra.mxu0 0.0
    %2001 = vmatprep.subr.mxu0 0.0
    %2002 = vmatpush2.msra.mxu0 0.0
    %2003 = vmatprep.mubr.f32.mxu0 0.0
    %2004 = vmatmul.mubr.f32.gmra.mxu0 %v1937
    %v2005 = vpop.f32.mrf.mxu0
    %v2006 = vadd.f32 0.0, %v2005
    %v2007 = vpop.f32.mrf.mxu0
    %2008 = vdwg.mxu0
    %vm2009 = vcmask 8192
    %v2010 = vsel %vm2009, %v1933, -inf
    %2011 = vmax.xlane.f32.xlu0 %v2010
    %v2012 = vpop.xlane.xlu0 %2011
    %v2013 = vsel %vm2009, %v2006, -inf
    %2014 = vmax.xlane.f32.xlu0 %v2013
    %v2015 = vpop.xlane.xlu0 %2014
    %v2016 = vsub.f32 %v1933, %v2012
    %v2017 = vsub.f32 %v2006, %v2015
    %v2018 = vmul.f32 %v2016, 1.442695
    %v2019 = vpow.pop %v2018
    %v2020 = vmul.f32 %v2017, 1.442695
    %v2021 = vpow.pop %v2020
    %v2022 = vsel %vm2009, %v2019, 0.0
    %2023 = vadd.xlane.f32.xlu0 %v2022
    %v2024 = vpop.xlane.xlu0 %2023
    %v2025 = vsel %vm2009, %v2021, 0.0
    %2026 = vadd.xlane.f32.xlu0 %v2025
    %v2027 = vpop.xlane.xlu0 %2026
    %v2028 = vrcp.pop %v2024
    %v2029 = vrcp.pop %v2027
    %v2030 = vmul.f32 %v2019, %v2028
    %v2031 = vmul.f32 %v2021, %v2029
    %2032 = vst.msk [vmem:[#allocation2] sm:$0x1] %vm2009, %v2030
    %2033 = vst.msk [vmem:[#allocation2 + $0x1] sm:$0x1] %vm2009, %v2031
    %vm2034 = vcmask 40960
    %2035 = vst.msk [vmem:[#allocation4] sm:$0x1] %vm2034, %v1843
    %2036 = vst.msk [vmem:[#allocation4 + $0x1] sm:$0x1] %vm2034, %v1844
    // Predicated region
    $region46: #{proticu_forward.1} parent=1 // pred_check
      _
    $region47: #{proticu_forward.1} parent=1 // pred_check_branch
      %2038 = sbr.rel (0) target = $region49
    $region48: #{proticu_forward.1} parent=1 // pred_region
      %s2040 = ssub.s32 32, 32
      %2041 = vsyncadd [#allocation3], %s2040
      %s2042 = sshll.u32 [#allocation2], 4
      %s2043 = int_to_ptr.vmem [resolvable:$true] %s2042
      %2048 = dma.vmem_to_hbm [thread:$0]  %s2043, 32, %s11, [#allocation3], 16, 16, 1
    $region49: #{proticu_forward.1} parent=1 // pred_fallthru
      _
    // Predicated region
    $region50: #{proticu_forward.1} parent=1 // pred_check
      _
    $region51: #{proticu_forward.1} parent=1 // pred_check_branch
      %2050 = sbr.rel (0) target = $region53
    $region52: #{proticu_forward.1} parent=1 // pred_region
      %s2052 = ssub.s32 32, 32
      %2053 = vsyncadd [#allocation5], %s2052
      %s2054 = sshll.u32 [#allocation4], 4
      %s2055 = int_to_ptr.vmem [resolvable:$true] %s2054
      %2060 = dma.vmem_to_hbm [thread:$0]  %s2055, 32, %s12, [#allocation5], 16, 16, 1
    $region53: #{proticu_forward.1} parent=1 // pred_fallthru
      _
    // Predicated region
    $region54: #{proticu_forward.1} parent=1 // pred_check
      _
    $region55: #{proticu_forward.1} parent=1 // pred_check_branch
      %2062 = sbr.rel (0) target = $region57
    $region56: #{proticu_forward.1} parent=1 // pred_region
      %2063 = dma.done [#allocation3], 32
    $region57: #{proticu_forward.1} parent=1 // pred_fallthru
      _
    // Predicated region
    $region58: #{proticu_forward.1} parent=1 // pred_check
      _
    $region59: #{proticu_forward.1} parent=1 // pred_check_branch
      %2065 = sbr.rel (0) target = $region61
    $region60: #{proticu_forward.1} parent=1 // pred_region
      %2066 = dma.done [#allocation5], 32
    $region61: #{proticu_forward.1} parent=1 // pred_fallthru
      _
    %2067 = vsyncpa [#allocation3], 1
    %2068 = vsyncpa [#allocation5], 1

</llo_original>
